<compile_context>
chip_gen: v5e
topology: v5e:2x2
jax: 0.10.0
libtpu: 0.0.40
codegen_flags: <defaults>
</compile_context>

<pallas_src>
import functools

import jax
import jax.numpy as jnp
import numpy as np
from jax.experimental import pallas as pl
from jax.experimental.pallas import tpu as pltpu


# ----------------------------------------------------------------------------
# helpers
# ----------------------------------------------------------------------------
def _round_up(x, m):
  return (x + m - 1) // m * m


def _compute_pad(k, s, size):
  """Exactly Unit3D.compute_pad."""
  if size % s == 0:
    return max(k - s, 0)
  return max(k - size % s, 0)


def _same_pad_3d(x, kshape, stride):
  """x: (N, T, H, W, C); zero-pads exactly like Unit3D.forward (F.pad)."""
  pads = []
  for d in range(3):
    p = _compute_pad(kshape[d], stride[d], x.shape[1 + d])
    pads.append((p // 2, p - p // 2))
  return jnp.pad(x, ((0, 0), pads[0], pads[1], pads[2], (0, 0)))


def _out_dims(padded_dims, kshape, stride):
  return tuple((padded_dims[d] - kshape[d]) // stride[d] + 1 for d in range(3))


def _default_tn_max():
  """Cout tile width: match the MXU (128-wide on v5e, 256 on v6e/v7x)."""
  try:
    kind = jax.devices()[0].device_kind.lower()
  except Exception:
    return 256
  if "v5 lite" in kind or "v5e" in kind or "v5lite" in kind:
    return 128
  return 256


def _im2col(xp, kshape, stride):
  """(N, Tp, Hp, Wp, C) SAME-padded -> (N, M, kvol*C), M = ot*oh*ow.

  Column order is (dt, dh, dw, cin), matching the weight reshape below.  For
  small Cin this is lane-dense: the Cin-minor layout would be padded to 128
  lanes in VMEM anyway, so folding kvol into the lane dim is near-free.
  """
  N, Tp, Hp, Wp, C = xp.shape
  kt, kh, kw = kshape
  st, sh, sw = stride
  ot, oh, ow = _out_dims((Tp, Hp, Wp), kshape, stride)
  cols = []
  for dt in range(kt):
    for dh in range(kh):
      for dw in range(kw):
        cols.append(xp[:, dt:dt + (ot - 1) * st + 1:st,
                       dh:dh + (oh - 1) * sh + 1:sh,
                       dw:dw + (ow - 1) * sw + 1:sw, :])
  x = jnp.stack(cols, axis=4)                      # (N, ot, oh, ow, kvol, C)
  return x.reshape(N, ot * oh * ow, len(cols) * C)


def _phase_split_flatten(xp, stride):
  """(N, Tp, Hp, Wp, C) -> (N, P, Rr, C) stride-phase-major, row-flattened."""
  N, Tp, Hp, Wp, C = xp.shape
  st, sh, sw = stride
  Tr, Hr, Wr = -(-Tp // st), -(-Hp // sh), -(-Wp // sw)
  xp = jnp.pad(xp, ((0, 0), (0, Tr * st - Tp), (0, Hr * sh - Hp),
                    (0, Wr * sw - Wp), (0, 0)))
  x = xp.reshape(N, Tr, st, Hr, sh, Wr, sw, C)
  x = jnp.transpose(x, (0, 2, 4, 6, 1, 3, 5, 7))
  return x.reshape(N, st * sh * sw, Tr * Hr * Wr, C), (Tr, Hr, Wr)


def _fit_rows(x, rows):
  cur = x.shape[2]
  if cur < rows:
    return jnp.pad(x, ((0, 0), (0, 0), (0, rows - cur), (0, 0)))
  return x[:, :, :rows, :]


# ----------------------------------------------------------------------------
# Pallas kernels
# ----------------------------------------------------------------------------
def _kfold_kernel(x_ref, w_ref, s_ref, b_ref, o_ref, *, apply_relu):
  """One (row-tile, batch, cout-tile) block; single full-K MXU matmul.

  x_ref: (1, tm, Kp) bf16   im2col'd activation rows (K = kvol*Cin, padded)
  w_ref: (Kp, tn)    bf16   reshaped conv weights
  s_ref, b_ref: (1, tn) f32 BN scale / (BN + conv) bias
  o_ref: (1, tm, tn)
  """
  acc = jnp.dot(x_ref[0], w_ref[...], preferred_element_type=jnp.float32)
  # Epilogue in f32 (padded/invalid rows also get bias+relu; sliced away
  # in the wrapper before any use).
  out = acc * s_ref[...] + b_ref[...]
  if apply_relu:
    out = jnp.maximum(out, 0.0)
  o_ref[0] = out.astype(o_ref.dtype)


def _taploop_kernel(x_ref, w_ref, s_ref, b_ref, o_ref, *, taps, apply_relu):
  """One (batch, cout-tile, row-tile) block; kvol shifted-row matmuls.

  x_ref: (1, P, rpad, Cin) bf16  phase-split, row-flattened activation
  w_ref: (kvol, Cin, tn)   bf16
  s_ref, b_ref: (1, tn)    f32
  o_ref: (1, tm, tn)
  taps:  static tuple of (phase, row_offset) per kernel tap.
  """
  tm = o_ref.shape[1]
  base = pl.multiple_of(pl.program_id(2) * tm, tm)
  acc = jnp.zeros(o_ref.shape[1:], jnp.float32)   # tm*tn*4 <= 128 KiB
  # TODO(synk): for very large kvol (e.g. 7x7x7 stems) switch to
  # lax.fori_loop over an SMEM tap table instead of a fully unrolled loop.
  for q, (phase, off) in enumerate(taps):
    a = x_ref[0, phase, pl.ds(base + off, tm), :]            # (tm, Cin)
    acc += jnp.dot(a, w_ref[q], preferred_element_type=jnp.float32)
  out = acc * s_ref[...] + b_ref[...]
  if apply_relu:
    out = jnp.maximum(out, 0.0)
  o_ref[0] = out.astype(o_ref.dtype)


# ----------------------------------------------------------------------------
# Unit3D forward (PyTorch NCTHW in / NCTHW out)
# ----------------------------------------------------------------------------
def unit3d_forward(x_ncthw, params, kernel_shape=(1, 1, 1), stride=(1, 1, 1),
                   use_batch_norm=True, use_bias=False, apply_relu=True,
                   out_dtype=jnp.bfloat16, kfold_max=512):
  kt, kh, kw = kernel_shape
  st, sh, sw = stride
  kvol = kt * kh * kw

  # layout: PyTorch NCTHW -> NTHWC
  x = jnp.transpose(x_ncthw, (0, 2, 3, 4, 1)).astype(jnp.float32)
  N, T, H, W, Cin = x.shape
  xp = _same_pad_3d(x, kernel_shape, stride).astype(jnp.bfloat16)
  _, Tp, Hp, Wp, _ = xp.shape
  ot, oh, ow = _out_dims((Tp, Hp, Wp), kernel_shape, stride)

  # ---- BN(eval) scale/bias + conv bias: applied in f32 AFTER the bf16 matmul
  w = params["w"].astype(jnp.float32)              # (Cout, Cin, kt, kh, kw)
  Cout = w.shape[0]
  if use_batch_norm:
    scale = params["gamma"] / jnp.sqrt(params["running_var"] + 1e-5)
    bias = params["beta"] - params["running_mean"] * scale
  else:
    scale = jnp.ones((Cout,), jnp.float32)
    bias = jnp.zeros((Cout,), jnp.float32)
  if use_bias:
    bias = bias + params["b"].astype(jnp.float32) * scale

  # ---- Cout tile: lane-dense, MXU-width aware --------------------------------
  tn_max = _default_tn_max()
  cout_128 = _round_up(Cout, 128)
  tn = cout_128 if cout_128 <= tn_max else tn_max
  cout_p = _round_up(Cout, tn)
  scale_p = jnp.pad(scale, (0, cout_p - Cout)).reshape(1, cout_p)
  bias_p = jnp.pad(bias, (0, cout_p - Cout)).reshape(1, cout_p)
  out_itemsize = jnp.dtype(out_dtype).itemsize

  if kvol * Cin <= kfold_max:
    # ---------------- K-FOLD path: one matmul with K = kvol*Cin --------------
    K = kvol * Cin
    Kp = _round_up(K, 128)
    M = ot * oh * ow
    tm = min(512, _round_up(M, 128))
    mp = _round_up(M, tm)

    x_cols = _im2col(xp, kernel_shape, stride)                 # (N, M, K) bf16
    x_cols = jnp.pad(x_cols, ((0, 0), (0, mp - M), (0, Kp - K)))
    w_mat = jnp.transpose(w, (2, 3, 4, 1, 0)).reshape(K, Cout)
    w_mat = jnp.pad(w_mat.astype(jnp.bfloat16),
                    ((0, Kp - K), (0, cout_p - Cout)))

    grid = (mp // tm, N, cout_p // tn)     # row tiles lead (v7x TC sharding)
    a_blk, w_blk = tm * Kp * 2, Kp * tn * 2
    o_blk, sb_blk = tm * tn * out_itemsize, 2 * tn * 4
    need = 2 * (a_blk + w_blk + sb_blk + o_blk)   # double-buffered blocks
    vmem_limit = int(min(max(2 * need, 32 << 20), 64 << 20))
    cost = pl.CostEstimate(
        flops=2 * N * M * K * Cout, transcendentals=0,
        bytes_accessed=int(x_cols.size * 2 + w_mat.size * 2 + 2 * cout_p * 4
                           + N * mp * cout_p * out_itemsize))

    out_flat = pl.pallas_call(
        functools.partial(_kfold_kernel, apply_relu=apply_relu),
        out_shape=jax.ShapeDtypeStruct((N, mp, cout_p), out_dtype),
        grid_spec=pltpu.PrefetchScalarGridSpec(
            num_scalar_prefetch=0,
            grid=grid,
            in_specs=[
                pl.BlockSpec((1, tm, Kp), lambda i, n, j: (n, i, 0)),
                pl.BlockSpec((Kp, tn), lambda i, n, j: (0, j)),
                pl.BlockSpec((1, tn), lambda i, n, j: (0, j)),
                pl.BlockSpec((1, tn), lambda i, n, j: (0, j)),
            ],
            out_specs=pl.BlockSpec((1, tm, tn), lambda i, n, j: (n, i, j)),
        ),
        compiler_params=pltpu.CompilerParams(
            dimension_semantics=("parallel", "parallel", "parallel"),
            vmem_limit_bytes=vmem_limit),
        cost_estimate=cost,
    )(x_cols, w_mat, scale_p, bias_p)

    out = out_flat[:, :M, :Cout].reshape(N, ot, oh, ow, Cout)
  else:
    # ------------- TAP-LOOP path: large Cin (no im2col HBM blowup) -----------
    x_flat, (Tr, Hr, Wr) = _phase_split_flatten(xp, stride)
    P = st * sh * sw
    w_k = jnp.transpose(w, (2, 3, 4, 1, 0)).reshape(kvol, Cin, Cout)
    w_k = jnp.pad(w_k.astype(jnp.bfloat16),
                  ((0, 0), (0, 0), (0, cout_p - Cout)))

    m_out = ot * Hr * Wr
    tm = 256 if tn == 128 else 128          # acc = tm*tn*4 B <= 128 KiB
    tm = min(tm, _round_up(m_out, 128))
    mp = _round_up(m_out, tm)

    # static (phase, row-offset) per kernel tap
    taps = []
    for dt in range(kt):
      for dh in range(kh):
        for dw in range(kw):
          taps.append(((dt % st) * sh * sw + (dh % sh) * sw + (dw % sw),
                       (dt // st) * Hr * Wr + (dh // sh) * Wr + (dw // sw)))
    off_max = max(o for _, o in taps)
    rpad = mp + off_max                     # keep every row slice in-bounds
    x_flat = _fit_rows(x_flat, rpad)

    # Per-batch-resident activation; single-buffer it when large so it fits
    # v7x's 64 MiB VMEM.  TODO(synk): row-tile the x BlockSpec with an
    # off_max halo for very large spatial extents.
    x_blk = P * rpad * Cin * 2
    x_kwargs = {}
    if x_blk > (4 << 20):
      x_kwargs["pipeline_mode"] = pl.Buffered(1)
    x_bufs = 1 if x_kwargs else 2

    # TODO(synk): if Cin grows so large that the (kvol, Cin, tn) weight block
    # overflows VMEM, add a Cin-chunk reduction grid axis ("arbitrary") with
    # a VMEM scratch accumulator.
    w_blk = kvol * Cin * tn * 2
    o_blk, sb_blk = tm * tn * out_itemsize, 2 * tn * 4
    need = x_bufs * x_blk + 2 * (w_blk + sb_blk + o_blk)
    vmem_limit = int(min(max(2 * need, 32 << 20), 64 << 20))

    grid = (N, cout_p // tn, mp // tm)
    cost = pl.CostEstimate(
        flops=2 * N * m_out * kvol * Cin * Cout, transcendentals=0,
        bytes_accessed=int(x_flat.size * 2 + w_k.size * 2 + 2 * cout_p * 4
                           + N * mp * cout_p * out_itemsize))

    out_flat = pl.pallas_call(
        functools.partial(_taploop_kernel, taps=tuple(taps),
                          apply_relu=apply_relu),
        out_shape=jax.ShapeDtypeStruct((N, mp, cout_p), out_dtype),
        grid_spec=pltpu.PrefetchScalarGridSpec(
            num_scalar_prefetch=0,
            grid=grid,
            in_specs=[
                # whole (phase-split) activation for this batch element; block
                # index only changes with n -> DMA'd once per batch.
                pl.BlockSpec((1, P, rpad, Cin),
                             lambda n, j, i: (n, 0, 0, 0), **x_kwargs),
                pl.BlockSpec((kvol, Cin, tn), lambda n, j, i: (0, 0, j)),
                pl.BlockSpec((1, tn), lambda n, j, i: (0, j)),
                pl.BlockSpec((1, tn), lambda n, j, i: (0, j)),
            ],
            out_specs=pl.BlockSpec((1, tm, tn), lambda n, j, i: (n, i, j)),
        ),
        compiler_params=pltpu.CompilerParams(
            dimension_semantics=("parallel", "parallel", "parallel"),
            vmem_limit_bytes=vmem_limit),
        cost_estimate=cost,
    )(x_flat, w_k, scale_p, bias_p)

    out = out_flat[:, :m_out, :Cout].reshape(N, ot, Hr, Wr, Cout)
    out = out[:, :, :oh, :ow, :]

  # NTHWC -> NCTHW
  return jnp.transpose(out, (0, 4, 1, 2, 3))


# ----------------------------------------------------------------------------
# pure-JAX reference (spec semantics) for verification
# ----------------------------------------------------------------------------
def unit3d_reference(x_ncthw, params, kernel_shape=(1, 1, 1), stride=(1, 1, 1),
                     use_batch_norm=True, use_bias=False, apply_relu=True):
  x = jnp.transpose(x_ncthw, (0, 2, 3, 4, 1)).astype(jnp.float32)
  xp = _same_pad_3d(x, kernel_shape, stride)
  # match the kernel's bf16 operand quantization (accumulation stays f32)
  xq = xp.astype(jnp.bfloat16).astype(jnp.float32)
  wq = jnp.transpose(params["w"].astype(jnp.float32), (2, 3, 4, 1, 0))
  wq = wq.astype(jnp.bfloat16).astype(jnp.float32)
  y = jax.lax.conv_general_dilated(
      xq, wq, window_strides=stride, padding="VALID",
      dimension_numbers=("NDHWC", "DHWIO", "NDHWC"),
      precision=jax.lax.Precision.HIGHEST)
  if use_bias:
    y = y + params["b"].astype(jnp.float32)
  if use_batch_norm:
    scale = params["gamma"] / jnp.sqrt(params["running_var"] + 1e-5)
    y = (y - params["running_mean"]) * scale + params["beta"]
  if apply_relu:
    y = jnp.maximum(y, 0.0)
  return jnp.transpose(y, (0, 4, 1, 2, 3))


# ----------------------------------------------------------------------------
# deterministic synthetic parameters
# ----------------------------------------------------------------------------
def init_unit3d_params(key, in_channels, out_channels, kernel_shape,
                       use_batch_norm=True, use_bias=False):
  kvol = kernel_shape[0] * kernel_shape[1] * kernel_shape[2]
  ks = jax.random.split(key, 6)
  fan_in = kvol * in_channels
  p = {"w": jax.random.normal(
      ks[0], (out_channels, in_channels) + tuple(kernel_shape),
      jnp.float32) * np.sqrt(2.0 / fan_in)}
  if use_batch_norm:
    p["gamma"] = 1.0 + 0.2 * jax.random.uniform(
        ks[1], (out_channels,), jnp.float32, -1.0, 1.0)
    p["beta"] = 0.1 * jax.random.normal(ks[2], (out_channels,), jnp.float32)
    p["running_mean"] = 0.1 * jax.random.normal(
        ks[3], (out_channels,), jnp.float32)
    p["running_var"] = 1.0 + 0.2 * jax.random.uniform(
        ks[4], (out_channels,), jnp.float32, -1.0, 1.0)
  if use_bias:
    p["b"] = 0.1 * jax.random.normal(ks[5], (out_channels,), jnp.float32)
  return p


# ----------------------------------------------------------------------------
if __name__ == "__main__":
  root = jax.random.PRNGKey(0)
  k1, k2, k3, k4, kx1, kx2, kx3, kx4 = jax.random.split(root, 8)

  cases = []

  # Case 1 (K-fold path): 3x3x3, stride 1, BN + ReLU.
  cfg1 = dict(kernel_shape=(3, 3, 3), stride=(1, 1, 1),
              use_batch_norm=True, use_bias=False, apply_relu=True)
  p1 = init_unit3d_params(k1, 8, 64, cfg1["kernel_shape"], True, False)
  x1 = jax.random.normal(kx1, (2, 8, 8, 16, 16), jnp.float32)      # NCTHW
  cases.append((x1, p1, cfg1, (2, 64, 8, 16, 16)))

  # Case 2 (K-fold path): 1x1x1 logits head: no BN, conv bias, no activation.
  cfg2 = dict(kernel_shape=(1, 1, 1), stride=(1, 1, 1),
              use_batch_norm=False, use_bias=True, apply_relu=False)
  p2 = init_unit3d_params(k2, 16, 40, cfg2["kernel_shape"], False, True)
  x2 = jax.random.normal(kx2, (2, 16, 4, 8, 8), jnp.float32)
  cases.append((x2, p2, cfg2, (2, 40, 4, 8, 8)))

  # Case 3 (K-fold path): strided stem-style conv: 3x3x3, stride 2, BN + ReLU.
  cfg3 = dict(kernel_shape=(3, 3, 3), stride=(2, 2, 2),
              use_batch_norm=True, use_bias=False, apply_relu=True)
  p3 = init_unit3d_params(k3, 4, 32, cfg3["kernel_shape"], True, False)
  x3 = jax.random.normal(kx3, (1, 4, 8, 16, 16), jnp.float32)
  cases.append((x3, p3, cfg3, (1, 32, 4, 8, 8)))

  # Case 4 (tap-loop path, large Cin): 3x3x3, stride 1, BN + ReLU.
  cfg4 = dict(kernel_shape=(3, 3, 3), stride=(1, 1, 1),
              use_batch_norm=True, use_bias=False, apply_relu=True)
  p4 = init_unit3d_params(k4, 128, 64, cfg4["kernel_shape"], True, False)
  x4 = jax.random.normal(kx4, (1, 128, 4, 8, 8), jnp.float32)
  cases.append((x4, p4, cfg4, (1, 64, 4, 8, 8)))

  for x, p, cfg, expected_shape in cases:
    out = jax.block_until_ready(unit3d_forward(x, p, **cfg))
    ref = unit3d_reference(x, p, **cfg)
    assert out.shape == expected_shape, (out.shape, expected_shape)
    assert bool(jnp.all(jnp.isfinite(out)))
    out_f = out.astype(jnp.float32)
    ref_q = ref.astype(out.dtype).astype(jnp.float32)   # compare at out dtype
    err = float(jnp.max(jnp.abs(out_f - ref_q)))
    tol = 3e-2 * (float(jnp.max(jnp.abs(ref))) + 1.0)
    assert err < tol, (err, tol)

  print("KERNEL_OK")
</pallas_src>

<mosaic_0001>
module attributes {stable_mosaic.version = 11 : i64} {
  func.func @_kfold_kernel(%arg0: i32, %arg1: i32, %arg2: i32, %arg3: memref<1x512x256xbf16, #tpu.memory_space<vmem>>, %arg4: memref<256x128xbf16, #tpu.memory_space<vmem>>, %arg5: memref<1x128xf32, #tpu.memory_space<vmem>>, %arg6: memref<1x128xf32, #tpu.memory_space<vmem>>, %arg7: memref<1x512x128xbf16, #tpu.memory_space<vmem>>) attributes {dimension_semantics = [#tpu.dimension_semantics<parallel>, #tpu.dimension_semantics<parallel>, #tpu.dimension_semantics<parallel>], iteration_bounds = array<i64: 4, 2, 1>, scalar_prefetch = 0 : i64, scratch_operands = 0 : i64, tpu.core_type = #tpu.core_type<tc>, window_params = [{transform_indices = @transform_0, window_bounds = array<i64: 1, 512, 256>}, {transform_indices = @transform_1, window_bounds = array<i64: 256, 128>}, {transform_indices = @transform_2, window_bounds = array<i64: 1, 128>}, {transform_indices = @transform_3, window_bounds = array<i64: 1, 128>}, {transform_indices = @transform_4, window_bounds = array<i64: 1, 512, 128>}]} {
    %c0 = arith.constant 0 : index
    %c0_0 = arith.constant 0 : index
    %c0_1 = arith.constant 0 : index
    %0 = vector.load %arg3[%c0, %c0_0, %c0_1] : memref<1x512x256xbf16, #tpu.memory_space<vmem>>, vector<1x512x256xbf16>
    %1 = vector.shape_cast %0 : vector<1x512x256xbf16> to vector<512x256xbf16>
    %c0_2 = arith.constant 0 : index
    %c0_3 = arith.constant 0 : index
    %2 = vector.load %arg4[%c0_2, %c0_3] : memref<256x128xbf16, #tpu.memory_space<vmem>>, vector<256x128xbf16>
    %cst = arith.constant dense<0.000000e+00> : vector<512x128xf32>
    %3 = tpu.matmul %1, %2, %cst {dimension_numbers = #tpu.dot_dimension_numbers<[1], [0], [0], [1], [0, 0, 1, 1], [], []>} : vector<512x256xbf16>, vector<256x128xbf16>, vector<512x128xf32> -> vector<512x128xf32>
    %c0_4 = arith.constant 0 : index
    %c0_5 = arith.constant 0 : index
    %4 = vector.load %arg5[%c0_4, %c0_5] : memref<1x128xf32, #tpu.memory_space<vmem>>, vector<1x128xf32>
    %5 = vector.broadcast %4 : vector<1x128xf32> to vector<512x128xf32>
    %6 = arith.mulf %3, %5 : vector<512x128xf32>
    %c0_6 = arith.constant 0 : index
    %c0_7 = arith.constant 0 : index
    %7 = vector.load %arg6[%c0_6, %c0_7] : memref<1x128xf32, #tpu.memory_space<vmem>>, vector<1x128xf32>
    %8 = vector.broadcast %7 : vector<1x128xf32> to vector<512x128xf32>
    %9 = arith.addf %6, %8 : vector<512x128xf32>
    %cst_8 = arith.constant 0.000000e+00 : f32
    %10 = vector.broadcast %cst_8 : f32 to vector<512x128xf32>
    %11 = arith.maximumf %9, %10 : vector<512x128xf32>
    %12 = arith.truncf %11 : vector<512x128xf32> to vector<512x128xbf16>
    %c0_9 = arith.constant 0 : index
    %c0_10 = arith.constant 0 : index
    %c0_11 = arith.constant 0 : index
    %13 = vector.load %arg7[%c0_9, %c0_10, %c0_11] : memref<1x512x128xbf16, #tpu.memory_space<vmem>>, vector<1x512x128xbf16>
    %14 = vector.shape_cast %13 : vector<1x512x128xbf16> to vector<512x128xbf16>
    %15 = vector.shape_cast %12 : vector<512x128xbf16> to vector<1x512x128xbf16>
    tpu.vector_store %arg7[%c0_9, %c0_10, %c0_11], %15 {strides = array<i32>} : memref<1x512x128xbf16, #tpu.memory_space<vmem>>, vector<1x512x128xbf16>,
    return
  }
  func.func @transform_0(%arg0: i32, %arg1: i32, %arg2: i32) -> (i32, i32, i32) {
    %c0_i32 = arith.constant 0 : i32
    %c0_i32_0 = arith.constant 0 : i32
    return %arg1, %arg0, %c0_i32 : i32, i32, i32
  }
  func.func @transform_1(%arg0: i32, %arg1: i32, %arg2: i32) -> (i32, i32) {
    %c0_i32 = arith.constant 0 : i32
    %c0_i32_0 = arith.constant 0 : i32
    return %c0_i32, %arg2 : i32, i32
  }
  func.func @transform_2(%arg0: i32, %arg1: i32, %arg2: i32) -> (i32, i32) {
    %c0_i32 = arith.constant 0 : i32
    %c0_i32_0 = arith.constant 0 : i32
    return %c0_i32, %arg2 : i32, i32
  }
  func.func @transform_3(%arg0: i32, %arg1: i32, %arg2: i32) -> (i32, i32) {
    %c0_i32 = arith.constant 0 : i32
    %c0_i32_0 = arith.constant 0 : i32
    return %c0_i32, %arg2 : i32, i32
  }
  func.func @transform_4(%arg0: i32, %arg1: i32, %arg2: i32) -> (i32, i32, i32) {
    %c0_i32 = arith.constant 0 : i32
    return %arg1, %arg0, %arg2 : i32, i32, i32
  }
}

</mosaic_0001>

<llo_original>
// kernel: tpu_custom_call.1
$region0: #{tpu_custom_call.1}
  #allocation0 [shape = 'u32[]', space=smem, size = 0x4, offset = 0x4, fixed_abs, tag = 'smem constant byte address 0x4 - core index']
  #allocation1 [shape = 'u32[72,128]{1,0:T(1,128)}', space=vmem, size = 0x9000, scoped, tag = 'internal scratch']
  %s0 = inlined_call_operand.hbm [shape: bf16[2,2048,256], index: 0, kind: input, shape index: {}]
  %s1 = inlined_call_operand.hbm [shape: bf16[256,128], index: 1, kind: input, shape index: {}]
  %s2 = inlined_call_operand.hbm [shape: f32[1,128], index: 2, kind: input, shape index: {}]
  %s3 = inlined_call_operand.hbm [shape: f32[1,128], index: 3, kind: input, shape index: {}]
  %s4 = inlined_call_operand.hbm [shape: bf16[2,2048,128], index: 4, kind: output, shape index: {}]
  %s5 = sld [smem:[#allocation0]]
  $region65: #{tpu_custom_call.1} parent=0
    _
  %s7 = ssub.s32 1, %s5
  %s8 = scalar_select 0, %s7, %s5
  $region1: #{tpu_custom_call.1} parent=0
    #allocation2 [shape = 'u8[524288]{0}', space=vmem, size = 0x80000, scoped, tag = 'input window, operand 0']
    #allocation3 [shape = 's32[2]{0}', space=sflag, size = 0x8, scoped, tag = 'scoped memory for tpu_custom_call.1']
    #allocation4 [shape = 's32[2]{0}', space=sflag, size = 0x8, scoped, tag = 'scoped memory for tpu_custom_call.1']
    #allocation5 [shape = 'u8[65536]{0}', space=vmem, size = 0x10000, scoped, tag = 'input window, operand 1, single buffered']
    #allocation6 [shape = 's32[1]{0}', space=sflag, size = 0x4, scoped, tag = 'scoped memory for tpu_custom_call.1']
    #allocation7 [shape = 'u8[512]{0}', space=vmem, size = 0x400, scoped, tag = 'input window, operand 2, single buffered']
    #allocation8 [shape = 'u8[512]{0}', space=vmem, size = 0x400, scoped, tag = 'input window, operand 3, single buffered']
    #allocation9 [shape = 's32[1]{0}', space=sflag, size = 0x4, scoped, tag = 'scoped memory for tpu_custom_call.1']
    #allocation10 [shape = 'u8[262144]{0}', space=vmem, size = 0x40000, scoped, tag = 'output window, operand 0']
    %9 = vsyncpa [#allocation3], 0
    %s10 = scalar_lea.sflag [#allocation3], 1
    %11 = vsyncpa %s10, 0
    %12 = vsyncpa [#allocation6], 0
    %13 = vsyncpa [#allocation9], 0
    %14 = vsyncpa [#allocation4], 0
    %s15 = scalar_lea.sflag [#allocation4], 1
    %16 = vsyncpa %s15, 0
    loop: start=0, step=1, limit=10
    $region2: #{tpu_custom_call.1} parent=1 // loop_pre_header
      _
    $region3: #{tpu_custom_call.1} parent=1 // loop_header
      %s18 = sphi 0, %s22
      %p19 = scmp.ge.s32.totalorder %s18, 10
      %s25 = sphi 0, %s44
      %s26 = sphi 0, %s40
      %s27 = sphi 0, %s36
      %s28 = sphi 0, %s25
      %s29 = sphi 0, %s26
      %s30 = sphi 0, %s27
      %s31 = sphi 0, %s28
      %s32 = sphi 0, %s29
      %s33 = sphi 0, %s30
      %s49 = sphi 0, %s51
      %s52 = sphi 0, %s49
      %s53 = sphi 0, %s52
      %s69 = sphi 0, %s53
      %s75 = sphi 0, %s77
      %s78 = sphi 0, %s75
      %s79 = sphi 0, %s78
      %s95 = sphi 0, %s79
      %s101 = sphi 0, %s103
      %s104 = sphi 0, %s101
      %s105 = sphi 0, %s104
      %s121 = sphi 0, %s105
      %s127 = sphi 0, %s129
      %s130 = sphi 0, %s127
      %s131 = sphi 0, %s130
      %s147 = sphi 0, %s131
      %s157 = sphi 0, %s159
      %s160 = sphi 0, %s157
      %s161 = sphi 0, %s160
      %s177 = sphi 0, %s161
    $region4: #{tpu_custom_call.1} parent=1 // loop_header_branch
      %21 = sbr.rel (%p19) target = $region8
    $region5: #{tpu_custom_call.1} parent=1 // loop_body
      %s23 = ssub.s32 %s18, 1
      %s24 = ssub.s32 %s18, 2
      %s34 = sadd.s32 1, %s27
      %p35 = scmp.ge.s32.totalorder %s34, 1
      %s36 = scalar_select %p35, 0, %s34
      %s37 = sadd.s32 1, %s26
      %s38 = scalar_select %p35, %s37, %s26
      %p39 = scmp.ge.s32.totalorder %s38, 2
      %s40 = scalar_select %p39, 0, %s38
      %s41 = sadd.s32 1, %s25
      %s42 = scalar_select %p39, %s41, %s25
      %p43 = scmp.ge.s32.totalorder %s42, 4
      %s44 = scalar_select %p43, 0, %s42
      %s45 = ssub.s32 %s26, %s40
      %s46 = ssub.s32 %s25, %s44
      %s47 = sor.u32 %s45, %s46
      %p48 = scmp.eq.s32.totalorder %s47, 0
      %s50 = sadd.s32 %s49, 1
      %s51 = scalar_select %p48, %s49, %s50
      %p54 = pneg %p48
      %p55 = scmp.eq.s32.totalorder %s18, 7
      %p56 = por %p54, %p55
      %p57 = scmp.ne.s32.totalorder %s49, %s52
      %p58 = scmp.eq.s32.totalorder %s18, 0
      %p59 = por %p57, %p58
      %p60 = scmp.ne.s32.totalorder %s49, %s52
      %p61 = scmp.eq.s32.totalorder %s23, 7
      %p62 = por %p60, %p61
      %p63 = scmp.ne.s32.totalorder %s52, %s53
      %p64 = scmp.eq.s32.totalorder %s23, 0
      %p65 = por %p63, %p64
      %p66 = scmp.ne.s32.totalorder %s52, %s53
      %p67 = scmp.eq.s32.totalorder %s24, 7
      %p68 = por %p66, %p67
      %p70 = scmp.ne.s32.totalorder %s53, %s69
      %p71 = scmp.eq.s32.totalorder %s24, 0
      %p72 = por %p70, %p71
      %s73 = ssub.s32 %s27, %s36
      %p74 = scmp.eq.s32.totalorder %s73, 0
      %s76 = sadd.s32 %s75, 1
      %s77 = scalar_select %p74, %s75, %s76
      %p80 = pneg %p74
      %p81 = scmp.eq.s32.totalorder %s18, 7
      %p82 = por %p80, %p81
      %p83 = scmp.ne.s32.totalorder %s75, %s78
      %p84 = scmp.eq.s32.totalorder %s18, 0
      %p85 = por %p83, %p84
      %p86 = scmp.ne.s32.totalorder %s75, %s78
      %p87 = scmp.eq.s32.totalorder %s23, 7
      %p88 = por %p86, %p87
      %p89 = scmp.ne.s32.totalorder %s78, %s79
      %p90 = scmp.eq.s32.totalorder %s23, 0
      %p91 = por %p89, %p90
      %p92 = scmp.ne.s32.totalorder %s78, %s79
      %p93 = scmp.eq.s32.totalorder %s24, 7
      %p94 = por %p92, %p93
      %p96 = scmp.ne.s32.totalorder %s79, %s95
      %p97 = scmp.eq.s32.totalorder %s24, 0
      %p98 = por %p96, %p97
      %s99 = ssub.s32 %s27, %s36
      %p100 = scmp.eq.s32.totalorder %s99, 0
      %s102 = sadd.s32 %s101, 1
      %s103 = scalar_select %p100, %s101, %s102
      %p106 = pneg %p100
      %p107 = scmp.eq.s32.totalorder %s18, 7
      %p108 = por %p106, %p107
      %p109 = scmp.ne.s32.totalorder %s101, %s104
      %p110 = scmp.eq.s32.totalorder %s18, 0
      %p111 = por %p109, %p110
      %p112 = scmp.ne.s32.totalorder %s101, %s104
      %p113 = scmp.eq.s32.totalorder %s23, 7
      %p114 = por %p112, %p113
      %p115 = scmp.ne.s32.totalorder %s104, %s105
      %p116 = scmp.eq.s32.totalorder %s23, 0
      %p117 = por %p115, %p116
      %p118 = scmp.ne.s32.totalorder %s104, %s105
      %p119 = scmp.eq.s32.totalorder %s24, 7
      %p120 = por %p118, %p119
      %p122 = scmp.ne.s32.totalorder %s105, %s121
      %p123 = scmp.eq.s32.totalorder %s24, 0
      %p124 = por %p122, %p123
      %s125 = ssub.s32 %s27, %s36
      %p126 = scmp.eq.s32.totalorder %s125, 0
      %s128 = sadd.s32 %s127, 1
      %s129 = scalar_select %p126, %s127, %s128
      %p132 = pneg %p126
      %p133 = scmp.eq.s32.totalorder %s18, 7
      %p134 = por %p132, %p133
      %p135 = scmp.ne.s32.totalorder %s127, %s130
      %p136 = scmp.eq.s32.totalorder %s18, 0
      %p137 = por %p135, %p136
      %p138 = scmp.ne.s32.totalorder %s127, %s130
      %p139 = scmp.eq.s32.totalorder %s23, 7
      %p140 = por %p138, %p139
      %p141 = scmp.ne.s32.totalorder %s130, %s131
      %p142 = scmp.eq.s32.totalorder %s23, 0
      %p143 = por %p141, %p142
      %p144 = scmp.ne.s32.totalorder %s130, %s131
      %p145 = scmp.eq.s32.totalorder %s24, 7
      %p146 = por %p144, %p145
      %p148 = scmp.ne.s32.totalorder %s131, %s147
      %p149 = scmp.eq.s32.totalorder %s24, 0
      %p150 = por %p148, %p149
      %s151 = ssub.s32 %s26, %s40
      %s152 = ssub.s32 %s25, %s44
      %s153 = sor.u32 %s151, %s152
      %s154 = ssub.s32 %s27, %s36
      %s155 = sor.u32 %s153, %s154
      %p156 = scmp.eq.s32.totalorder %s155, 0
      %s158 = sadd.s32 %s157, 1
      %s159 = scalar_select %p156, %s157, %s158
      %p162 = pneg %p156
      %p163 = scmp.eq.s32.totalorder %s18, 7
      %p164 = por %p162, %p163
      %p165 = scmp.ne.s32.totalorder %s157, %s160
      %p166 = scmp.eq.s32.totalorder %s18, 0
      %p167 = por %p165, %p166
      %p168 = scmp.ne.s32.totalorder %s157, %s160
      %p169 = scmp.eq.s32.totalorder %s23, 7
      %p170 = por %p168, %p169
      %p171 = scmp.ne.s32.totalorder %s160, %s161
      %p172 = scmp.eq.s32.totalorder %s23, 0
      %p173 = por %p171, %p172
      %p174 = scmp.ne.s32.totalorder %s160, %s161
      %p175 = scmp.eq.s32.totalorder %s24, 7
      %p176 = por %p174, %p175
      %p178 = scmp.ne.s32.totalorder %s161, %s177
      %p179 = scmp.eq.s32.totalorder %s24, 0
      %p180 = por %p178, %p179
      %p181 = scmp.le.s32.totalorder 1, %s18
      %p182 = scmp.lt.s32.totalorder %s18, 9
      %p183 = pnand %p181, %p182
      %p184 = pneg %p183
      // Predicated region
      $region9: #{tpu_custom_call.1} parent=5 // pred_check
        _
      $region10: #{tpu_custom_call.1} parent=5 // pred_check_branch
        %186 = sbr.rel (%p183) target = $region12
      $region11: #{tpu_custom_call.1} parent=5 // pred_region
        %s187 = ssub.s32 %s18, 1
        // Predicated region
        $region13: #{tpu_custom_call.1} parent=11 // pred_check
          %p188 = pneg %p91
        $region14: #{tpu_custom_call.1} parent=11 // pred_check_branch
          %190 = sbr.rel (%p188) target = $region16
        $region15: #{tpu_custom_call.1} parent=11 // pred_region
          %192 = vsyncadd [#allocation6], 0
          %s193 = smul.addr %s30, 4
          %s194 = scalar_lea.hbm %s1, %s193
          %s195 = sshll.u32 %s194, 4
          %s196 = int_to_ptr.hbm [resolvable:$true] %s195
          %s197 = sshll.u32 [#allocation5], 4
          %s198 = int_to_ptr.vmem [resolvable:$true] %s197
          %203 = dma.hbm_to_vmem [thread:$0]  %s196, 2048, %s198, [#allocation6], 64, 64, 4
        $region16: #{tpu_custom_call.1} parent=11 // pred_fallthru
          _
        // Predicated region
        $region17: #{tpu_custom_call.1} parent=11 // pred_check
          %p204 = pneg %p117
        $region18: #{tpu_custom_call.1} parent=11 // pred_check_branch
          %206 = sbr.rel (%p204) target = $region20
        $region19: #{tpu_custom_call.1} parent=11 // pred_region
          %208 = vsyncadd [#allocation6], 0
          %s209 = scalar_lea.hbm %s2, %s30
          %s211 = sshll.u32 %s209, 4
          %s212 = int_to_ptr.hbm [resolvable:$true] %s211
          %s213 = sshll.u32 [#allocation7], 4
          %s214 = int_to_ptr.vmem [resolvable:$true] %s213
          %216 = dma.hbm_to_vmem [thread:$0]  %s212, 16, %s214, [#allocation6]
        $region20: #{tpu_custom_call.1} parent=11 // pred_fallthru
          _
        // Predicated region
        $region21: #{tpu_custom_call.1} parent=11 // pred_check
          %p217 = pneg %p143
        $region22: #{tpu_custom_call.1} parent=11 // pred_check_branch
          %219 = sbr.rel (%p217) target = $region24
        $region23: #{tpu_custom_call.1} parent=11 // pred_region
          %221 = vsyncadd [#allocation9], 0
          %s222 = scalar_lea.hbm %s3, %s30
          %s224 = sshll.u32 %s222, 4
          %s225 = int_to_ptr.hbm [resolvable:$true] %s224
          %s226 = sshll.u32 [#allocation8], 4
          %s227 = int_to_ptr.vmem [resolvable:$true] %s226
          %229 = dma.hbm_to_vmem [thread:$0]  %s225, 16, %s227, [#allocation9]
        $region24: #{tpu_custom_call.1} parent=11 // pred_fallthru
          _
      $region12: #{tpu_custom_call.1} parent=5 // pred_fallthru
        _
      %p230 = scmp.lt.s32.totalorder %s18, 8
      // Predicated region
      $region25: #{tpu_custom_call.1} parent=5 // pred_check
        %p231 = pneg %p230
      $region26: #{tpu_custom_call.1} parent=5 // pred_check_branch
        %233 = sbr.rel (%p231) target = $region28
      $region27: #{tpu_custom_call.1} parent=5 // pred_region
        // Predicated region
        $region29: #{tpu_custom_call.1} parent=27 // pred_check
          %p234 = pneg %p59
        $region30: #{tpu_custom_call.1} parent=27 // pred_check_branch
          %236 = sbr.rel (%p234) target = $region32
        $region31: #{tpu_custom_call.1} parent=27 // pred_region
          %s237 = sand.u32 %s49, 1
          %s238 = scalar_lea.sflag [#allocation3], %s237
          %s239 = sand.u32 %s49, 1
          %s240 = smul.addr %s239, 512
          %s241 = scalar_lea.vmem [#allocation2], %s240
          %s242 = smul.u32 64, %s25
          %244 = vsyncadd %s238, 0
          %s245 = smul.addr %s242, 2
          %s246 = smul.addr %s26, 512
          %s247 = sadd.s32 %s245, %s246
          %s248 = smul.addr %s247, 4
          %s249 = scalar_lea.hbm %s0, %s248
          %s250 = sshll.u32 %s249, 4
          %s251 = int_to_ptr.hbm [resolvable:$true] %s250
          %s252 = sshll.u32 %s241, 4
          %s253 = int_to_ptr.vmem [resolvable:$true] %s252
          %258 = dma.hbm_to_vmem [thread:$0]  %s251, 8192, %s253, %s238, 128, 128, 8
        $region32: #{tpu_custom_call.1} parent=27 // pred_fallthru
          _
      $region28: #{tpu_custom_call.1} parent=5 // pred_fallthru
        _
      %p259 = scmp.le.s32.totalorder 1, %s18
      %p260 = scmp.lt.s32.totalorder %s18, 9
      %p261 = pnand %p259, %p260
      %p262 = pneg %p261
      // Predicated region
      $region33: #{tpu_custom_call.1} parent=5 // pred_check
        _
      $region34: #{tpu_custom_call.1} parent=5 // pred_check_branch
        %264 = sbr.rel (%p261) target = $region36
      $region35: #{tpu_custom_call.1} parent=5 // pred_region
        %s265 = ssub.s32 %s18, 1
        %s266 = sand.u32 %s52, 1
        %s267 = scalar_lea.sflag [#allocation3], %s266
        %s268 = sand.u32 %s52, 1
        %s269 = smul.addr %s268, 512
        %s270 = scalar_lea.vmem [#allocation2], %s269
        // Predicated region
        $region37: #{tpu_custom_call.1} parent=35 // pred_check
          %p271 = pneg %p65
        $region38: #{tpu_custom_call.1} parent=35 // pred_check_branch
          %273 = sbr.rel (%p271) target = $region40
        $region39: #{tpu_custom_call.1} parent=35 // pred_region
          %275 = dma.done %s267, 8192
        $region40: #{tpu_custom_call.1} parent=35 // pred_fallthru
          _
        // Predicated region
        $region41: #{tpu_custom_call.1} parent=35 // pred_check
          %p276 = pneg %p91
        $region42: #{tpu_custom_call.1} parent=35 // pred_check_branch
          %278 = sbr.rel (%p276) target = $region44
        $region43: #{tpu_custom_call.1} parent=35 // pred_region
          %280 = dma.done [#allocation6], 2048
        $region44: #{tpu_custom_call.1} parent=35 // pred_fallthru
          _
        // Predicated region
        $region45: #{tpu_custom_call.1} parent=35 // pred_check
          %p281 = pneg %p117
        $region46: #{tpu_custom_call.1} parent=35 // pred_check_branch
          %283 = sbr.rel (%p281) target = $region48
        $region47: #{tpu_custom_call.1} parent=35 // pred_region
          %285 = dma.done [#allocation6], 16
        $region48: #{tpu_custom_call.1} parent=35 // pred_fallthru
          _
        // Predicated region
        $region49: #{tpu_custom_call.1} parent=35 // pred_check
          %p286 = pneg %p143
        $region50: #{tpu_custom_call.1} parent=35 // pred_check_branch
          %288 = sbr.rel (%p286) target = $region52
        $region51: #{tpu_custom_call.1} parent=35 // pred_region
          %290 = dma.done [#allocation9], 16
        $region52: #{tpu_custom_call.1} parent=35 // pred_fallthru
          _
        %s291 = sand.u32 %s52, 1
        %s292 = scalar_lea.sflag [#allocation3], %s291
        %s293 = sand.u32 %s52, 1
        %s294 = smul.addr %s293, 512
        %s295 = scalar_lea.vmem [#allocation2], %s294
        %p296 = pneg %p65
        %p297 = pneg %p62
        %p298 = pneg %p91
        %p299 = pneg %p88
        %p300 = pneg %p117
        %p301 = pneg %p114
        %p302 = pneg %p143
        %p303 = pneg %p140
        %p304 = pneg %p173
        %p305 = pneg %p170
        %s306 = sand.u32 %s160, 1
        %s307 = scalar_lea.sflag [#allocation4], %s306
        %s308 = sand.u32 %s160, 1
        %s309 = smul.addr %s308, 256
        %s310 = scalar_lea.vmem [#allocation10], %s309
        %s311 = smul.u32 64, %s28
        %s312 = smul.u32 64, %s28
        %v313 = vld [vmem:[%s270] sm:$0xff]
        %v314 = vld [vmem:[%s270 + $0x8] sm:$0xff]
        %v315 = vld [vmem:[%s270 + $0x10] sm:$0xff]
        %v316 = vld [vmem:[%s270 + $0x18] sm:$0xff]
        %v317 = vld [vmem:[%s270 + $0x20] sm:$0xff]
        %v318 = vld [vmem:[%s270 + $0x28] sm:$0xff]
        %v319 = vld [vmem:[%s270 + $0x30] sm:$0xff]
        %v320 = vld [vmem:[%s270 + $0x38] sm:$0xff]
        %v321 = vld [vmem:[%s270 + $0x40] sm:$0xff]
        %v322 = vld [vmem:[%s270 + $0x48] sm:$0xff]
        %v323 = vld [vmem:[%s270 + $0x50] sm:$0xff]
        %v324 = vld [vmem:[%s270 + $0x58] sm:$0xff]
        %v325 = vld [vmem:[%s270 + $0x60] sm:$0xff]
        %v326 = vld [vmem:[%s270 + $0x68] sm:$0xff]
        %v327 = vld [vmem:[%s270 + $0x70] sm:$0xff]
        %v328 = vld [vmem:[%s270 + $0x78] sm:$0xff]
        %v329 = vld [vmem:[%s270 + $0x80] sm:$0xff]
        %v330 = vld [vmem:[%s270 + $0x88] sm:$0xff]
        %v331 = vld [vmem:[%s270 + $0x90] sm:$0xff]
        %v332 = vld [vmem:[%s270 + $0x98] sm:$0xff]
        %v333 = vld [vmem:[%s270 + $0xa0] sm:$0xff]
        %v334 = vld [vmem:[%s270 + $0xa8] sm:$0xff]
        %v335 = vld [vmem:[%s270 + $0xb0] sm:$0xff]
        %v336 = vld [vmem:[%s270 + $0xb8] sm:$0xff]
        %v337 = vld [vmem:[%s270 + $0xc0] sm:$0xff]
        %v338 = vld [vmem:[%s270 + $0xc8] sm:$0xff]
        %v339 = vld [vmem:[%s270 + $0xd0] sm:$0xff]
        %v340 = vld [vmem:[%s270 + $0xd8] sm:$0xff]
        %v341 = vld [vmem:[%s270 + $0xe0] sm:$0xff]
        %v342 = vld [vmem:[%s270 + $0xe8] sm:$0xff]
        %v343 = vld [vmem:[%s270 + $0xf0] sm:$0xff]
        %v344 = vld [vmem:[%s270 + $0xf8] sm:$0xff]
        %v345 = vld [vmem:[%s270 + $0x100] sm:$0xff]
        %v346 = vld [vmem:[%s270 + $0x108] sm:$0xff]
        %v347 = vld [vmem:[%s270 + $0x110] sm:$0xff]
        %v348 = vld [vmem:[%s270 + $0x118] sm:$0xff]
        %v349 = vld [vmem:[%s270 + $0x120] sm:$0xff]
        %v350 = vld [vmem:[%s270 + $0x128] sm:$0xff]
        %v351 = vld [vmem:[%s270 + $0x130] sm:$0xff]
        %v352 = vld [vmem:[%s270 + $0x138] sm:$0xff]
        %v353 = vld [vmem:[%s270 + $0x140] sm:$0xff]
        %v354 = vld [vmem:[%s270 + $0x148] sm:$0xff]
        %v355 = vld [vmem:[%s270 + $0x150] sm:$0xff]
        %v356 = vld [vmem:[%s270 + $0x158] sm:$0xff]
        %v357 = vld [vmem:[%s270 + $0x160] sm:$0xff]
        %v358 = vld [vmem:[%s270 + $0x168] sm:$0xff]
        %v359 = vld [vmem:[%s270 + $0x170] sm:$0xff]
        %v360 = vld [vmem:[%s270 + $0x178] sm:$0xff]
        %v361 = vld [vmem:[%s270 + $0x180] sm:$0xff]
        %v362 = vld [vmem:[%s270 + $0x188] sm:$0xff]
        %v363 = vld [vmem:[%s270 + $0x190] sm:$0xff]
        %v364 = vld [vmem:[%s270 + $0x198] sm:$0xff]
        %v365 = vld [vmem:[%s270 + $0x1a0] sm:$0xff]
        %v366 = vld [vmem:[%s270 + $0x1a8] sm:$0xff]
        %v367 = vld [vmem:[%s270 + $0x1b0] sm:$0xff]
        %v368 = vld [vmem:[%s270 + $0x1b8] sm:$0xff]
        %v369 = vld [vmem:[%s270 + $0x1c0] sm:$0xff]
        %v370 = vld [vmem:[%s270 + $0x1c8] sm:$0xff]
        %v371 = vld [vmem:[%s270 + $0x1d0] sm:$0xff]
        %v372 = vld [vmem:[%s270 + $0x1d8] sm:$0xff]
        %v373 = vld [vmem:[%s270 + $0x1e0] sm:$0xff]
        %v374 = vld [vmem:[%s270 + $0x1e8] sm:$0xff]
        %v375 = vld [vmem:[%s270 + $0x1f0] sm:$0xff]
        %v376 = vld [vmem:[%s270 + $0x1f8] sm:$0xff]
        %v377 = vld [vmem:[#allocation5] sm:$0xf]
        %v378 = vld [vmem:[#allocation5 + $0x4] sm:$0xf]
        %v379 = vld [vmem:[#allocation5 + $0x8] sm:$0xf]
        %v380 = vld [vmem:[#allocation5 + $0xc] sm:$0xf]
        %v381 = vld [vmem:[#allocation5 + $0x10] sm:$0xf]
        %v382 = vld [vmem:[#allocation5 + $0x14] sm:$0xf]
        %v383 = vld [vmem:[#allocation5 + $0x18] sm:$0xf]
        %v384 = vld [vmem:[#allocation5 + $0x1c] sm:$0xf]
        %v385 = vld [vmem:[#allocation5 + $0x20] sm:$0xf]
        %v386 = vld [vmem:[#allocation5 + $0x24] sm:$0xf]
        %v387 = vld [vmem:[#allocation5 + $0x28] sm:$0xf]
        %v388 = vld [vmem:[#allocation5 + $0x2c] sm:$0xf]
        %v389 = vld [vmem:[#allocation5 + $0x30] sm:$0xf]
        %v390 = vld [vmem:[#allocation5 + $0x34] sm:$0xf]
        %v391 = vld [vmem:[#allocation5 + $0x38] sm:$0xf]
        %v392 = vld [vmem:[#allocation5 + $0x3c] sm:$0xf]
        %v393 = vld [vmem:[#allocation5 + $0x40] sm:$0xf]
        %v394 = vld [vmem:[#allocation5 + $0x44] sm:$0xf]
        %v395 = vld [vmem:[#allocation5 + $0x48] sm:$0xf]
        %v396 = vld [vmem:[#allocation5 + $0x4c] sm:$0xf]
        %v397 = vld [vmem:[#allocation5 + $0x50] sm:$0xf]
        %v398 = vld [vmem:[#allocation5 + $0x54] sm:$0xf]
        %v399 = vld [vmem:[#allocation5 + $0x58] sm:$0xf]
        %v400 = vld [vmem:[#allocation5 + $0x5c] sm:$0xf]
        %v401 = vld [vmem:[#allocation5 + $0x60] sm:$0xf]
        %v402 = vld [vmem:[#allocation5 + $0x64] sm:$0xf]
        %v403 = vld [vmem:[#allocation5 + $0x68] sm:$0xf]
        %v404 = vld [vmem:[#allocation5 + $0x6c] sm:$0xf]
        %v405 = vld [vmem:[#allocation5 + $0x70] sm:$0xf]
        %v406 = vld [vmem:[#allocation5 + $0x74] sm:$0xf]
        %v407 = vld [vmem:[#allocation5 + $0x78] sm:$0xf]
        %v408 = vld [vmem:[#allocation5 + $0x7c] sm:$0xf]
        %v473 = vunpack.c.l.b16 %v313
        %v474 = vunpack.c.h.b16 %v313
        %v475 = vunpack.c.l.b16 %v314
        %v476 = vunpack.c.h.b16 %v314
        %v477 = vunpack.c.l.b16 %v315
        %v478 = vunpack.c.h.b16 %v315
        %v479 = vunpack.c.l.b16 %v316
        %v480 = vunpack.c.h.b16 %v316
        %v481 = vunpack.c.l.b16 %v317
        %v482 = vunpack.c.h.b16 %v317
        %v483 = vunpack.c.l.b16 %v318
        %v484 = vunpack.c.h.b16 %v318
        %v485 = vunpack.c.l.b16 %v319
        %v486 = vunpack.c.h.b16 %v319
        %v487 = vunpack.c.l.b16 %v320
        %v488 = vunpack.c.h.b16 %v320
        %v489 = vunpack.c.l.b16 %v321
        %v490 = vunpack.c.h.b16 %v321
        %v491 = vunpack.c.l.b16 %v322
        %v492 = vunpack.c.h.b16 %v322
        %v493 = vunpack.c.l.b16 %v323
        %v494 = vunpack.c.h.b16 %v323
        %v495 = vunpack.c.l.b16 %v324
        %v496 = vunpack.c.h.b16 %v324
        %v497 = vunpack.c.l.b16 %v325
        %v498 = vunpack.c.h.b16 %v325
        %v499 = vunpack.c.l.b16 %v326
        %v500 = vunpack.c.h.b16 %v326
        %v501 = vunpack.c.l.b16 %v327
        %v502 = vunpack.c.h.b16 %v327
        %v503 = vunpack.c.l.b16 %v328
        %v504 = vunpack.c.h.b16 %v328
        %v505 = vunpack.c.l.b16 %v329
        %v506 = vunpack.c.h.b16 %v329
        %v507 = vunpack.c.l.b16 %v330
        %v508 = vunpack.c.h.b16 %v330
        %v509 = vunpack.c.l.b16 %v331
        %v510 = vunpack.c.h.b16 %v331
        %v511 = vunpack.c.l.b16 %v332
        %v512 = vunpack.c.h.b16 %v332
        %v513 = vunpack.c.l.b16 %v333
        %v514 = vunpack.c.h.b16 %v333
        %v515 = vunpack.c.l.b16 %v334
        %v516 = vunpack.c.h.b16 %v334
        %v517 = vunpack.c.l.b16 %v335
        %v518 = vunpack.c.h.b16 %v335
        %v519 = vunpack.c.l.b16 %v336
        %v520 = vunpack.c.h.b16 %v336
        %v521 = vunpack.c.l.b16 %v337
        %v522 = vunpack.c.h.b16 %v337
        %v523 = vunpack.c.l.b16 %v338
        %v524 = vunpack.c.h.b16 %v338
        %v525 = vunpack.c.l.b16 %v339
        %v526 = vunpack.c.h.b16 %v339
        %v527 = vunpack.c.l.b16 %v340
        %v528 = vunpack.c.h.b16 %v340
        %v529 = vunpack.c.l.b16 %v341
        %v530 = vunpack.c.h.b16 %v341
        %v531 = vunpack.c.l.b16 %v342
        %v532 = vunpack.c.h.b16 %v342
        %v533 = vunpack.c.l.b16 %v343
        %v534 = vunpack.c.h.b16 %v343
        %v535 = vunpack.c.l.b16 %v344
        %v536 = vunpack.c.h.b16 %v344
        %v537 = vunpack.c.l.b16 %v345
        %v538 = vunpack.c.h.b16 %v345
        %v539 = vunpack.c.l.b16 %v346
        %v540 = vunpack.c.h.b16 %v346
        %v541 = vunpack.c.l.b16 %v347
        %v542 = vunpack.c.h.b16 %v347
        %v543 = vunpack.c.l.b16 %v348
        %v544 = vunpack.c.h.b16 %v348
        %v545 = vunpack.c.l.b16 %v349
        %v546 = vunpack.c.h.b16 %v349
        %v547 = vunpack.c.l.b16 %v350
        %v548 = vunpack.c.h.b16 %v350
        %v549 = vunpack.c.l.b16 %v351
        %v550 = vunpack.c.h.b16 %v351
        %v551 = vunpack.c.l.b16 %v352
        %v552 = vunpack.c.h.b16 %v352
        %v553 = vunpack.c.l.b16 %v353
        %v554 = vunpack.c.h.b16 %v353
        %v555 = vunpack.c.l.b16 %v354
        %v556 = vunpack.c.h.b16 %v354
        %v557 = vunpack.c.l.b16 %v355
        %v558 = vunpack.c.h.b16 %v355
        %v559 = vunpack.c.l.b16 %v356
        %v560 = vunpack.c.h.b16 %v356
        %v561 = vunpack.c.l.b16 %v357
        %v562 = vunpack.c.h.b16 %v357
        %v563 = vunpack.c.l.b16 %v358
        %v564 = vunpack.c.h.b16 %v358
        %v565 = vunpack.c.l.b16 %v359
        %v566 = vunpack.c.h.b16 %v359
        %v567 = vunpack.c.l.b16 %v360
        %v568 = vunpack.c.h.b16 %v360
        %v569 = vunpack.c.l.b16 %v361
        %v570 = vunpack.c.h.b16 %v361
        %v571 = vunpack.c.l.b16 %v362
        %v572 = vunpack.c.h.b16 %v362
        %v573 = vunpack.c.l.b16 %v363
        %v574 = vunpack.c.h.b16 %v363
        %v575 = vunpack.c.l.b16 %v364
        %v576 = vunpack.c.h.b16 %v364
        %v577 = vunpack.c.l.b16 %v365
        %v578 = vunpack.c.h.b16 %v365
        %v579 = vunpack.c.l.b16 %v366
        %v580 = vunpack.c.h.b16 %v366
        %v581 = vunpack.c.l.b16 %v367
        %v582 = vunpack.c.h.b16 %v367
        %v583 = vunpack.c.l.b16 %v368
        %v584 = vunpack.c.h.b16 %v368
        %v585 = vunpack.c.l.b16 %v369
        %v586 = vunpack.c.h.b16 %v369
        %v587 = vunpack.c.l.b16 %v370
        %v588 = vunpack.c.h.b16 %v370
        %v589 = vunpack.c.l.b16 %v371
        %v590 = vunpack.c.h.b16 %v371
        %v591 = vunpack.c.l.b16 %v372
        %v592 = vunpack.c.h.b16 %v372
        %v593 = vunpack.c.l.b16 %v373
        %v594 = vunpack.c.h.b16 %v373
        %v595 = vunpack.c.l.b16 %v374
        %v596 = vunpack.c.h.b16 %v374
        %v597 = vunpack.c.l.b16 %v375
        %v598 = vunpack.c.h.b16 %v375
        %v599 = vunpack.c.l.b16 %v376
        %v600 = vunpack.c.h.b16 %v376
        %v601 = vpack.c.b16 %v475, %v473
        %v602 = vpack.c.b16 %v476, %v474
        %v603 = vpack.c.b16 %v479, %v477
        %v604 = vpack.c.b16 %v480, %v478
        %v605 = vpack.c.b16 %v483, %v481
        %v606 = vpack.c.b16 %v484, %v482
        %v607 = vpack.c.b16 %v487, %v485
        %v608 = vpack.c.b16 %v488, %v486
        %v609 = vpack.c.b16 %v491, %v489
        %v610 = vpack.c.b16 %v492, %v490
        %v611 = vpack.c.b16 %v495, %v493
        %v612 = vpack.c.b16 %v496, %v494
        %v613 = vpack.c.b16 %v499, %v497
        %v614 = vpack.c.b16 %v500, %v498
        %v615 = vpack.c.b16 %v503, %v501
        %v616 = vpack.c.b16 %v504, %v502
        %v617 = vpack.c.b16 %v507, %v505
        %v618 = vpack.c.b16 %v508, %v506
        %v619 = vpack.c.b16 %v511, %v509
        %v620 = vpack.c.b16 %v512, %v510
        %v621 = vpack.c.b16 %v515, %v513
        %v622 = vpack.c.b16 %v516, %v514
        %v623 = vpack.c.b16 %v519, %v517
        %v624 = vpack.c.b16 %v520, %v518
        %v625 = vpack.c.b16 %v523, %v521
        %v626 = vpack.c.b16 %v524, %v522
        %v627 = vpack.c.b16 %v527, %v525
        %v628 = vpack.c.b16 %v528, %v526
        %v629 = vpack.c.b16 %v531, %v529
        %v630 = vpack.c.b16 %v532, %v530
        %v631 = vpack.c.b16 %v535, %v533
        %v632 = vpack.c.b16 %v536, %v534
        %v633 = vpack.c.b16 %v539, %v537
        %v634 = vpack.c.b16 %v540, %v538
        %v635 = vpack.c.b16 %v543, %v541
        %v636 = vpack.c.b16 %v544, %v542
        %v637 = vpack.c.b16 %v547, %v545
        %v638 = vpack.c.b16 %v548, %v546
        %v639 = vpack.c.b16 %v551, %v549
        %v640 = vpack.c.b16 %v552, %v550
        %v641 = vpack.c.b16 %v555, %v553
        %v642 = vpack.c.b16 %v556, %v554
        %v643 = vpack.c.b16 %v559, %v557
        %v644 = vpack.c.b16 %v560, %v558
        %v645 = vpack.c.b16 %v563, %v561
        %v646 = vpack.c.b16 %v564, %v562
        %v647 = vpack.c.b16 %v567, %v565
        %v648 = vpack.c.b16 %v568, %v566
        %v649 = vpack.c.b16 %v571, %v569
        %v650 = vpack.c.b16 %v572, %v570
        %v651 = vpack.c.b16 %v575, %v573
        %v652 = vpack.c.b16 %v576, %v574
        %v653 = vpack.c.b16 %v579, %v577
        %v654 = vpack.c.b16 %v580, %v578
        %v655 = vpack.c.b16 %v583, %v581
        %v656 = vpack.c.b16 %v584, %v582
        %v657 = vpack.c.b16 %v587, %v585
        %v658 = vpack.c.b16 %v588, %v586
        %v659 = vpack.c.b16 %v591, %v589
        %v660 = vpack.c.b16 %v592, %v590
        %v661 = vpack.c.b16 %v595, %v593
        %v662 = vpack.c.b16 %v596, %v594
        %v663 = vpack.c.b16 %v599, %v597
        %v664 = vpack.c.b16 %v600, %v598
        %v761 = vunpack.c.l.b16 %v377
        %v762 = vunpack.c.l.b16 %v378
        %v763 = vunpack.c.l.b16 %v379
        %v764 = vunpack.c.l.b16 %v380
        %v765 = vunpack.c.l.b16 %v381
        %v766 = vunpack.c.l.b16 %v382
        %v767 = vunpack.c.l.b16 %v383
        %v768 = vunpack.c.l.b16 %v384
        %v769 = vunpack.c.l.b16 %v385
        %v770 = vunpack.c.l.b16 %v386
        %v771 = vunpack.c.l.b16 %v387
        %v772 = vunpack.c.l.b16 %v388
        %v773 = vunpack.c.l.b16 %v389
        %v774 = vunpack.c.l.b16 %v390
        %v775 = vunpack.c.l.b16 %v391
        %v776 = vunpack.c.l.b16 %v392
        %v777 = vunpack.c.l.b16 %v393
        %v778 = vunpack.c.l.b16 %v394
        %v779 = vunpack.c.l.b16 %v395
        %v780 = vunpack.c.l.b16 %v396
        %v781 = vunpack.c.l.b16 %v397
        %v782 = vunpack.c.l.b16 %v398
        %v783 = vunpack.c.l.b16 %v399
        %v784 = vunpack.c.l.b16 %v400
        %v785 = vunpack.c.l.b16 %v401
        %v786 = vunpack.c.l.b16 %v402
        %v787 = vunpack.c.l.b16 %v403
        %v788 = vunpack.c.l.b16 %v404
        %v789 = vunpack.c.l.b16 %v405
        %v790 = vunpack.c.l.b16 %v406
        %v791 = vunpack.c.l.b16 %v407
        %v792 = vunpack.c.l.b16 %v408
        %v793 = vpack.c.b16 %v762, %v761
        %v794 = vpack.c.b16 %v764, %v763
        %v795 = vpack.c.b16 %v766, %v765
        %v796 = vpack.c.b16 %v768, %v767
        %v797 = vpack.c.b16 %v770, %v769
        %v798 = vpack.c.b16 %v772, %v771
        %v799 = vpack.c.b16 %v774, %v773
        %v800 = vpack.c.b16 %v776, %v775
        %v801 = vpack.c.b16 %v778, %v777
        %v802 = vpack.c.b16 %v780, %v779
        %v803 = vpack.c.b16 %v782, %v781
        %v804 = vpack.c.b16 %v784, %v783
        %v805 = vpack.c.b16 %v786, %v785
        %v806 = vpack.c.b16 %v788, %v787
        %v807 = vpack.c.b16 %v790, %v789
        %v808 = vpack.c.b16 %v792, %v791
        %825 = vmatpush.bf16.msra.mxu0 %v800
        %826 = vmatpush.bf16.msra.mxu0 %v799
        %827 = vmatpush.bf16.msra.mxu0 %v798
        %828 = vmatpush.bf16.msra.mxu0 %v797
        %829 = vmatpush.bf16.msra.mxu0 %v796
        %830 = vmatpush.bf16.msra.mxu0 %v795
        %831 = vmatpush.bf16.msra.mxu0 %v794
        %832 = vmatpush.bf16.msra.mxu0 %v793
        %833 = vmatmul.bf16.gmra.mxu0 %v601
        %v834 = vpop.f32.mrf.mxu0
        %v835 = vadd.f32 0.0, %v834
        %v836 = vpop.f32.mrf.mxu0
        %v837 = vadd.f32 0.0, %v836
        %838 = vmatmul.bf16.gmra.mxu0 %v603
        %v839 = vpop.f32.mrf.mxu0
        %v840 = vadd.f32 0.0, %v839
        %v841 = vpop.f32.mrf.mxu0
        %v842 = vadd.f32 0.0, %v841
        %843 = vmatmul.bf16.gmra.mxu0 %v605
        %v844 = vpop.f32.mrf.mxu0
        %v845 = vadd.f32 0.0, %v844
        %v846 = vpop.f32.mrf.mxu0
        %v847 = vadd.f32 0.0, %v846
        %848 = vmatmul.bf16.gmra.mxu0 %v607
        %v849 = vpop.f32.mrf.mxu0
        %v850 = vadd.f32 0.0, %v849
        %v851 = vpop.f32.mrf.mxu0
        %v852 = vadd.f32 0.0, %v851
        %853 = vmatmul.bf16.gmra.mxu0 %v609
        %v854 = vpop.f32.mrf.mxu0
        %v855 = vadd.f32 0.0, %v854
        %v856 = vpop.f32.mrf.mxu0
        %v857 = vadd.f32 0.0, %v856
        %858 = vmatmul.bf16.gmra.mxu0 %v611
        %v859 = vpop.f32.mrf.mxu0
        %v860 = vadd.f32 0.0, %v859
        %v861 = vpop.f32.mrf.mxu0
        %v862 = vadd.f32 0.0, %v861
        %863 = vmatmul.bf16.gmra.mxu0 %v613
        %v864 = vpop.f32.mrf.mxu0
        %v865 = vadd.f32 0.0, %v864
        %v866 = vpop.f32.mrf.mxu0
        %v867 = vadd.f32 0.0, %v866
        %868 = vmatmul.bf16.gmra.mxu0 %v615
        %v869 = vpop.f32.mrf.mxu0
        %v870 = vadd.f32 0.0, %v869
        %v871 = vpop.f32.mrf.mxu0
        %v872 = vadd.f32 0.0, %v871
        %873 = vmatmul.bf16.gmra.mxu0 %v617
        %v874 = vpop.f32.mrf.mxu0
        %v875 = vadd.f32 0.0, %v874
        %v876 = vpop.f32.mrf.mxu0
        %v877 = vadd.f32 0.0, %v876
        %878 = vmatmul.bf16.gmra.mxu0 %v619
        %v879 = vpop.f32.mrf.mxu0
        %v880 = vadd.f32 0.0, %v879
        %v881 = vpop.f32.mrf.mxu0
        %v882 = vadd.f32 0.0, %v881
        %883 = vmatmul.bf16.gmra.mxu0 %v621
        %v884 = vpop.f32.mrf.mxu0
        %v885 = vadd.f32 0.0, %v884
        %v886 = vpop.f32.mrf.mxu0
        %v887 = vadd.f32 0.0, %v886
        %888 = vmatmul.bf16.gmra.mxu0 %v623
        %v889 = vpop.f32.mrf.mxu0
        %v890 = vadd.f32 0.0, %v889
        %v891 = vpop.f32.mrf.mxu0
        %v892 = vadd.f32 0.0, %v891
        %893 = vmatmul.bf16.gmra.mxu0 %v625
        %v894 = vpop.f32.mrf.mxu0
        %v895 = vadd.f32 0.0, %v894
        %v896 = vpop.f32.mrf.mxu0
        %v897 = vadd.f32 0.0, %v896
        %898 = vmatmul.bf16.gmra.mxu0 %v627
        %v899 = vpop.f32.mrf.mxu0
        %v900 = vadd.f32 0.0, %v899
        %v901 = vpop.f32.mrf.mxu0
        %v902 = vadd.f32 0.0, %v901
        %903 = vmatmul.bf16.gmra.mxu0 %v629
        %v904 = vpop.f32.mrf.mxu0
        %v905 = vadd.f32 0.0, %v904
        %v906 = vpop.f32.mrf.mxu0
        %v907 = vadd.f32 0.0, %v906
        %908 = vmatmul.bf16.gmra.mxu0 %v631
        %v909 = vpop.f32.mrf.mxu0
        %v910 = vadd.f32 0.0, %v909
        %v911 = vpop.f32.mrf.mxu0
        %v912 = vadd.f32 0.0, %v911
        %913 = vmatmul.bf16.gmra.mxu0 %v633
        %v914 = vpop.f32.mrf.mxu0
        %v915 = vadd.f32 0.0, %v914
        %v916 = vpop.f32.mrf.mxu0
        %v917 = vadd.f32 0.0, %v916
        %918 = vmatmul.bf16.gmra.mxu0 %v635
        %v919 = vpop.f32.mrf.mxu0
        %v920 = vadd.f32 0.0, %v919
        %v921 = vpop.f32.mrf.mxu0
        %v922 = vadd.f32 0.0, %v921
        %923 = vmatmul.bf16.gmra.mxu0 %v637
        %v924 = vpop.f32.mrf.mxu0
        %v925 = vadd.f32 0.0, %v924
        %v926 = vpop.f32.mrf.mxu0
        %v927 = vadd.f32 0.0, %v926
        %928 = vmatmul.bf16.gmra.mxu0 %v639
        %v929 = vpop.f32.mrf.mxu0
        %v930 = vadd.f32 0.0, %v929
        %v931 = vpop.f32.mrf.mxu0
        %v932 = vadd.f32 0.0, %v931
        %933 = vmatmul.bf16.gmra.mxu0 %v641
        %v934 = vpop.f32.mrf.mxu0
        %v935 = vadd.f32 0.0, %v934
        %v936 = vpop.f32.mrf.mxu0
        %v937 = vadd.f32 0.0, %v936
        %938 = vmatmul.bf16.gmra.mxu0 %v643
        %v939 = vpop.f32.mrf.mxu0
        %v940 = vadd.f32 0.0, %v939
        %v941 = vpop.f32.mrf.mxu0
        %v942 = vadd.f32 0.0, %v941
        %943 = vmatmul.bf16.gmra.mxu0 %v645
        %v944 = vpop.f32.mrf.mxu0
        %v945 = vadd.f32 0.0, %v944
        %v946 = vpop.f32.mrf.mxu0
        %v947 = vadd.f32 0.0, %v946
        %948 = vmatmul.bf16.gmra.mxu0 %v647
        %v949 = vpop.f32.mrf.mxu0
        %v950 = vadd.f32 0.0, %v949
        %v951 = vpop.f32.mrf.mxu0
        %v952 = vadd.f32 0.0, %v951
        %953 = vmatmul.bf16.gmra.mxu0 %v649
        %v954 = vpop.f32.mrf.mxu0
        %v955 = vadd.f32 0.0, %v954
        %v956 = vpop.f32.mrf.mxu0
        %v957 = vadd.f32 0.0, %v956
        %958 = vmatmul.bf16.gmra.mxu0 %v651
        %v959 = vpop.f32.mrf.mxu0
        %v960 = vadd.f32 0.0, %v959
        %v961 = vpop.f32.mrf.mxu0
        %v962 = vadd.f32 0.0, %v961
        %963 = vmatmul.bf16.gmra.mxu0 %v653
        %v964 = vpop.f32.mrf.mxu0
        %v965 = vadd.f32 0.0, %v964
        %v966 = vpop.f32.mrf.mxu0
        %v967 = vadd.f32 0.0, %v966
        %968 = vmatmul.bf16.gmra.mxu0 %v655
        %v969 = vpop.f32.mrf.mxu0
        %v970 = vadd.f32 0.0, %v969
        %v971 = vpop.f32.mrf.mxu0
        %v972 = vadd.f32 0.0, %v971
        %973 = vmatmul.bf16.gmra.mxu0 %v657
        %v974 = vpop.f32.mrf.mxu0
        %v975 = vadd.f32 0.0, %v974
        %v976 = vpop.f32.mrf.mxu0
        %v977 = vadd.f32 0.0, %v976
        %978 = vmatmul.bf16.gmra.mxu0 %v659
        %v979 = vpop.f32.mrf.mxu0
        %v980 = vadd.f32 0.0, %v979
        %v981 = vpop.f32.mrf.mxu0
        %v982 = vadd.f32 0.0, %v981
        %983 = vmatmul.bf16.gmra.mxu0 %v661
        %v984 = vpop.f32.mrf.mxu0
        %v985 = vadd.f32 0.0, %v984
        %v986 = vpop.f32.mrf.mxu0
        %v987 = vadd.f32 0.0, %v986
        %988 = vmatmul.bf16.gmra.mxu0 %v663
        %v989 = vpop.f32.mrf.mxu0
        %v990 = vadd.f32 0.0, %v989
        %v991 = vpop.f32.mrf.mxu0
        %v992 = vadd.f32 0.0, %v991
        %993 = vdwg.mxu0
        %994 = vmatpush.bf16.msra.mxu0 %v808
        %995 = vmatpush.bf16.msra.mxu0 %v807
        %996 = vmatpush.bf16.msra.mxu0 %v806
        %997 = vmatpush.bf16.msra.mxu0 %v805
        %998 = vmatpush.bf16.msra.mxu0 %v804
        %999 = vmatpush.bf16.msra.mxu0 %v803
        %1000 = vmatpush.bf16.msra.mxu0 %v802
        %1001 = vmatpush.bf16.msra.mxu0 %v801
        %1002 = vmatmul.bf16.gmra.mxu0 %v602
        %v1003 = vpop.f32.mrf.mxu0
        %v1004 = vadd.f32 %v835, %v1003
        %v1005 = vpop.f32.mrf.mxu0
        %v1006 = vadd.f32 %v837, %v1005
        %1007 = vmatmul.bf16.gmra.mxu0 %v604
        %v1008 = vpop.f32.mrf.mxu0
        %v1009 = vadd.f32 %v840, %v1008
        %v1010 = vpop.f32.mrf.mxu0
        %v1011 = vadd.f32 %v842, %v1010
        %1012 = vmatmul.bf16.gmra.mxu0 %v606
        %v1013 = vpop.f32.mrf.mxu0
        %v1014 = vadd.f32 %v845, %v1013
        %v1015 = vpop.f32.mrf.mxu0
        %v1016 = vadd.f32 %v847, %v1015
        %1017 = vmatmul.bf16.gmra.mxu0 %v608
        %v1018 = vpop.f32.mrf.mxu0
        %v1019 = vadd.f32 %v850, %v1018
        %v1020 = vpop.f32.mrf.mxu0
        %v1021 = vadd.f32 %v852, %v1020
        %1022 = vmatmul.bf16.gmra.mxu0 %v610
        %v1023 = vpop.f32.mrf.mxu0
        %v1024 = vadd.f32 %v855, %v1023
        %v1025 = vpop.f32.mrf.mxu0
        %v1026 = vadd.f32 %v857, %v1025
        %1027 = vmatmul.bf16.gmra.mxu0 %v612
        %v1028 = vpop.f32.mrf.mxu0
        %v1029 = vadd.f32 %v860, %v1028
        %v1030 = vpop.f32.mrf.mxu0
        %v1031 = vadd.f32 %v862, %v1030
        %1032 = vmatmul.bf16.gmra.mxu0 %v614
        %v1033 = vpop.f32.mrf.mxu0
        %v1034 = vadd.f32 %v865, %v1033
        %v1035 = vpop.f32.mrf.mxu0
        %v1036 = vadd.f32 %v867, %v1035
        %1037 = vmatmul.bf16.gmra.mxu0 %v616
        %v1038 = vpop.f32.mrf.mxu0
        %v1039 = vadd.f32 %v870, %v1038
        %v1040 = vpop.f32.mrf.mxu0
        %v1041 = vadd.f32 %v872, %v1040
        %1042 = vmatmul.bf16.gmra.mxu0 %v618
        %v1043 = vpop.f32.mrf.mxu0
        %v1044 = vadd.f32 %v875, %v1043
        %v1045 = vpop.f32.mrf.mxu0
        %v1046 = vadd.f32 %v877, %v1045
        %1047 = vmatmul.bf16.gmra.mxu0 %v620
        %v1048 = vpop.f32.mrf.mxu0
        %v1049 = vadd.f32 %v880, %v1048
        %v1050 = vpop.f32.mrf.mxu0
        %v1051 = vadd.f32 %v882, %v1050
        %1052 = vmatmul.bf16.gmra.mxu0 %v622
        %v1053 = vpop.f32.mrf.mxu0
        %v1054 = vadd.f32 %v885, %v1053
        %v1055 = vpop.f32.mrf.mxu0
        %v1056 = vadd.f32 %v887, %v1055
        %1057 = vmatmul.bf16.gmra.mxu0 %v624
        %v1058 = vpop.f32.mrf.mxu0
        %v1059 = vadd.f32 %v890, %v1058
        %v1060 = vpop.f32.mrf.mxu0
        %v1061 = vadd.f32 %v892, %v1060
        %1062 = vmatmul.bf16.gmra.mxu0 %v626
        %v1063 = vpop.f32.mrf.mxu0
        %v1064 = vadd.f32 %v895, %v1063
        %v1065 = vpop.f32.mrf.mxu0
        %v1066 = vadd.f32 %v897, %v1065
        %1067 = vmatmul.bf16.gmra.mxu0 %v628
        %v1068 = vpop.f32.mrf.mxu0
        %v1069 = vadd.f32 %v900, %v1068
        %v1070 = vpop.f32.mrf.mxu0
        %v1071 = vadd.f32 %v902, %v1070
        %1072 = vmatmul.bf16.gmra.mxu0 %v630
        %v1073 = vpop.f32.mrf.mxu0
        %v1074 = vadd.f32 %v905, %v1073
        %v1075 = vpop.f32.mrf.mxu0
        %v1076 = vadd.f32 %v907, %v1075
        %1077 = vmatmul.bf16.gmra.mxu0 %v632
        %v1078 = vpop.f32.mrf.mxu0
        %v1079 = vadd.f32 %v910, %v1078
        %v1080 = vpop.f32.mrf.mxu0
        %v1081 = vadd.f32 %v912, %v1080
        %1082 = vmatmul.bf16.gmra.mxu0 %v634
        %v1083 = vpop.f32.mrf.mxu0
        %v1084 = vadd.f32 %v915, %v1083
        %v1085 = vpop.f32.mrf.mxu0
        %v1086 = vadd.f32 %v917, %v1085
        %1087 = vmatmul.bf16.gmra.mxu0 %v636
        %v1088 = vpop.f32.mrf.mxu0
        %v1089 = vadd.f32 %v920, %v1088
        %v1090 = vpop.f32.mrf.mxu0
        %v1091 = vadd.f32 %v922, %v1090
        %1092 = vmatmul.bf16.gmra.mxu0 %v638
        %v1093 = vpop.f32.mrf.mxu0
        %v1094 = vadd.f32 %v925, %v1093
        %v1095 = vpop.f32.mrf.mxu0
        %v1096 = vadd.f32 %v927, %v1095
        %1097 = vmatmul.bf16.gmra.mxu0 %v640
        %v1098 = vpop.f32.mrf.mxu0
        %v1099 = vadd.f32 %v930, %v1098
        %v1100 = vpop.f32.mrf.mxu0
        %v1101 = vadd.f32 %v932, %v1100
        %1102 = vmatmul.bf16.gmra.mxu0 %v642
        %v1103 = vpop.f32.mrf.mxu0
        %v1104 = vadd.f32 %v935, %v1103
        %v1105 = vpop.f32.mrf.mxu0
        %v1106 = vadd.f32 %v937, %v1105
        %1107 = vmatmul.bf16.gmra.mxu0 %v644
        %v1108 = vpop.f32.mrf.mxu0
        %v1109 = vadd.f32 %v940, %v1108
        %v1110 = vpop.f32.mrf.mxu0
        %v1111 = vadd.f32 %v942, %v1110
        %1112 = vmatmul.bf16.gmra.mxu0 %v646
        %v1113 = vpop.f32.mrf.mxu0
        %v1114 = vadd.f32 %v945, %v1113
        %v1115 = vpop.f32.mrf.mxu0
        %v1116 = vadd.f32 %v947, %v1115
        %1117 = vmatmul.bf16.gmra.mxu0 %v648
        %v1118 = vpop.f32.mrf.mxu0
        %v1119 = vadd.f32 %v950, %v1118
        %v1120 = vpop.f32.mrf.mxu0
        %v1121 = vadd.f32 %v952, %v1120
        %1122 = vmatmul.bf16.gmra.mxu0 %v650
        %v1123 = vpop.f32.mrf.mxu0
        %v1124 = vadd.f32 %v955, %v1123
        %v1125 = vpop.f32.mrf.mxu0
        %v1126 = vadd.f32 %v957, %v1125
        %1127 = vmatmul.bf16.gmra.mxu0 %v652
        %v1128 = vpop.f32.mrf.mxu0
        %v1129 = vadd.f32 %v960, %v1128
        %v1130 = vpop.f32.mrf.mxu0
        %v1131 = vadd.f32 %v962, %v1130
        %1132 = vmatmul.bf16.gmra.mxu0 %v654
        %v1133 = vpop.f32.mrf.mxu0
        %v1134 = vadd.f32 %v965, %v1133
        %v1135 = vpop.f32.mrf.mxu0
        %v1136 = vadd.f32 %v967, %v1135
        %1137 = vmatmul.bf16.gmra.mxu0 %v656
        %v1138 = vpop.f32.mrf.mxu0
        %v1139 = vadd.f32 %v970, %v1138
        %v1140 = vpop.f32.mrf.mxu0
        %v1141 = vadd.f32 %v972, %v1140
        %1142 = vmatmul.bf16.gmra.mxu0 %v658
        %v1143 = vpop.f32.mrf.mxu0
        %v1144 = vadd.f32 %v975, %v1143
        %v1145 = vpop.f32.mrf.mxu0
        %v1146 = vadd.f32 %v977, %v1145
        %1147 = vmatmul.bf16.gmra.mxu0 %v660
        %v1148 = vpop.f32.mrf.mxu0
        %v1149 = vadd.f32 %v980, %v1148
        %v1150 = vpop.f32.mrf.mxu0
        %v1151 = vadd.f32 %v982, %v1150
        %1152 = vmatmul.bf16.gmra.mxu0 %v662
        %v1153 = vpop.f32.mrf.mxu0
        %v1154 = vadd.f32 %v985, %v1153
        %v1155 = vpop.f32.mrf.mxu0
        %v1156 = vadd.f32 %v987, %v1155
        %1157 = vmatmul.bf16.gmra.mxu0 %v664
        %v1158 = vpop.f32.mrf.mxu0
        %v1159 = vadd.f32 %v990, %v1158
        %v1160 = vpop.f32.mrf.mxu0
        %v1161 = vadd.f32 %v992, %v1160
        %1162 = vdwg.mxu0
        %v1163 = vld [vmem:[#allocation7] sm:$0x1]
        %v1165 = vperm.slane %v1163, 0
        %v1167 = vmul.f32 %v1004, %v1165
        %v1168 = vmul.f32 %v1006, %v1165
        %v1169 = vmul.f32 %v1009, %v1165
        %v1170 = vmul.f32 %v1011, %v1165
        %v1171 = vmul.f32 %v1014, %v1165
        %v1172 = vmul.f32 %v1016, %v1165
        %v1173 = vmul.f32 %v1019, %v1165
        %v1174 = vmul.f32 %v1021, %v1165
        %v1175 = vmul.f32 %v1024, %v1165
        %v1176 = vmul.f32 %v1026, %v1165
        %v1177 = vmul.f32 %v1029, %v1165
        %v1178 = vmul.f32 %v1031, %v1165
        %v1179 = vmul.f32 %v1034, %v1165
        %v1180 = vmul.f32 %v1036, %v1165
        %v1181 = vmul.f32 %v1039, %v1165
        %v1182 = vmul.f32 %v1041, %v1165
        %v1183 = vmul.f32 %v1044, %v1165
        %v1184 = vmul.f32 %v1046, %v1165
        %v1185 = vmul.f32 %v1049, %v1165
        %v1186 = vmul.f32 %v1051, %v1165
        %v1187 = vmul.f32 %v1054, %v1165
        %v1188 = vmul.f32 %v1056, %v1165
        %v1189 = vmul.f32 %v1059, %v1165
        %v1190 = vmul.f32 %v1061, %v1165
        %v1191 = vmul.f32 %v1064, %v1165
        %v1192 = vmul.f32 %v1066, %v1165
        %v1193 = vmul.f32 %v1069, %v1165
        %v1194 = vmul.f32 %v1071, %v1165
        %v1195 = vmul.f32 %v1074, %v1165
        %v1196 = vmul.f32 %v1076, %v1165
        %v1197 = vmul.f32 %v1079, %v1165
        %v1198 = vmul.f32 %v1081, %v1165
        %v1199 = vmul.f32 %v1084, %v1165
        %v1200 = vmul.f32 %v1086, %v1165
        %v1201 = vmul.f32 %v1089, %v1165
        %v1202 = vmul.f32 %v1091, %v1165
        %v1203 = vmul.f32 %v1094, %v1165
        %v1204 = vmul.f32 %v1096, %v1165
        %v1205 = vmul.f32 %v1099, %v1165
        %v1206 = vmul.f32 %v1101, %v1165
        %v1207 = vmul.f32 %v1104, %v1165
        %v1208 = vmul.f32 %v1106, %v1165
        %v1209 = vmul.f32 %v1109, %v1165
        %v1210 = vmul.f32 %v1111, %v1165
        %v1211 = vmul.f32 %v1114, %v1165
        %v1212 = vmul.f32 %v1116, %v1165
        %v1213 = vmul.f32 %v1119, %v1165
        %v1214 = vmul.f32 %v1121, %v1165
        %v1215 = vmul.f32 %v1124, %v1165
        %v1216 = vmul.f32 %v1126, %v1165
        %v1217 = vmul.f32 %v1129, %v1165
        %v1218 = vmul.f32 %v1131, %v1165
        %v1219 = vmul.f32 %v1134, %v1165
        %v1220 = vmul.f32 %v1136, %v1165
        %v1221 = vmul.f32 %v1139, %v1165
        %v1222 = vmul.f32 %v1141, %v1165
        %v1223 = vmul.f32 %v1144, %v1165
        %v1224 = vmul.f32 %v1146, %v1165
        %v1225 = vmul.f32 %v1149, %v1165
        %v1226 = vmul.f32 %v1151, %v1165
        %v1227 = vmul.f32 %v1154, %v1165
        %v1228 = vmul.f32 %v1156, %v1165
        %v1229 = vmul.f32 %v1159, %v1165
        %v1230 = vmul.f32 %v1161, %v1165
        %v1231 = vld [vmem:[#allocation8] sm:$0x1]
        %v1233 = vperm.slane %v1231, 0
        %v1235 = vadd.f32 %v1167, %v1233
        %v1236 = vadd.f32 %v1168, %v1233
        %v1237 = vadd.f32 %v1169, %v1233
        %v1238 = vadd.f32 %v1170, %v1233
        %v1239 = vadd.f32 %v1171, %v1233
        %v1240 = vadd.f32 %v1172, %v1233
        %v1241 = vadd.f32 %v1173, %v1233
        %v1242 = vadd.f32 %v1174, %v1233
        %v1243 = vadd.f32 %v1175, %v1233
        %v1244 = vadd.f32 %v1176, %v1233
        %v1245 = vadd.f32 %v1177, %v1233
        %v1246 = vadd.f32 %v1178, %v1233
        %v1247 = vadd.f32 %v1179, %v1233
        %v1248 = vadd.f32 %v1180, %v1233
        %v1249 = vadd.f32 %v1181, %v1233
        %v1250 = vadd.f32 %v1182, %v1233
        %v1251 = vadd.f32 %v1183, %v1233
        %v1252 = vadd.f32 %v1184, %v1233
        %v1253 = vadd.f32 %v1185, %v1233
        %v1254 = vadd.f32 %v1186, %v1233
        %v1255 = vadd.f32 %v1187, %v1233
        %v1256 = vadd.f32 %v1188, %v1233
        %v1257 = vadd.f32 %v1189, %v1233
        %v1258 = vadd.f32 %v1190, %v1233
        %v1259 = vadd.f32 %v1191, %v1233
        %v1260 = vadd.f32 %v1192, %v1233
        %v1261 = vadd.f32 %v1193, %v1233
        %v1262 = vadd.f32 %v1194, %v1233
        %v1263 = vadd.f32 %v1195, %v1233
        %v1264 = vadd.f32 %v1196, %v1233
        %v1265 = vadd.f32 %v1197, %v1233
        %v1266 = vadd.f32 %v1198, %v1233
        %v1267 = vadd.f32 %v1199, %v1233
        %v1268 = vadd.f32 %v1200, %v1233
        %v1269 = vadd.f32 %v1201, %v1233
        %v1270 = vadd.f32 %v1202, %v1233
        %v1271 = vadd.f32 %v1203, %v1233
        %v1272 = vadd.f32 %v1204, %v1233
        %v1273 = vadd.f32 %v1205, %v1233
        %v1274 = vadd.f32 %v1206, %v1233
        %v1275 = vadd.f32 %v1207, %v1233
        %v1276 = vadd.f32 %v1208, %v1233
        %v1277 = vadd.f32 %v1209, %v1233
        %v1278 = vadd.f32 %v1210, %v1233
        %v1279 = vadd.f32 %v1211, %v1233
        %v1280 = vadd.f32 %v1212, %v1233
        %v1281 = vadd.f32 %v1213, %v1233
        %v1282 = vadd.f32 %v1214, %v1233
        %v1283 = vadd.f32 %v1215, %v1233
        %v1284 = vadd.f32 %v1216, %v1233
        %v1285 = vadd.f32 %v1217, %v1233
        %v1286 = vadd.f32 %v1218, %v1233
        %v1287 = vadd.f32 %v1219, %v1233
        %v1288 = vadd.f32 %v1220, %v1233
        %v1289 = vadd.f32 %v1221, %v1233
        %v1290 = vadd.f32 %v1222, %v1233
        %v1291 = vadd.f32 %v1223, %v1233
        %v1292 = vadd.f32 %v1224, %v1233
        %v1293 = vadd.f32 %v1225, %v1233
        %v1294 = vadd.f32 %v1226, %v1233
        %v1295 = vadd.f32 %v1227, %v1233
        %v1296 = vadd.f32 %v1228, %v1233
        %v1297 = vadd.f32 %v1229, %v1233
        %v1298 = vadd.f32 %v1230, %v1233
        %v1299 = vmax.f32 %v1235, 0.0
        %v1300 = vmax.f32 %v1236, 0.0
        %v1301 = vmax.f32 %v1237, 0.0
        %v1302 = vmax.f32 %v1238, 0.0
        %v1303 = vmax.f32 %v1239, 0.0
        %v1304 = vmax.f32 %v1240, 0.0
        %v1305 = vmax.f32 %v1241, 0.0
        %v1306 = vmax.f32 %v1242, 0.0
        %v1307 = vmax.f32 %v1243, 0.0
        %v1308 = vmax.f32 %v1244, 0.0
        %v1309 = vmax.f32 %v1245, 0.0
        %v1310 = vmax.f32 %v1246, 0.0
        %v1311 = vmax.f32 %v1247, 0.0
        %v1312 = vmax.f32 %v1248, 0.0
        %v1313 = vmax.f32 %v1249, 0.0
        %v1314 = vmax.f32 %v1250, 0.0
        %v1315 = vmax.f32 %v1251, 0.0
        %v1316 = vmax.f32 %v1252, 0.0
        %v1317 = vmax.f32 %v1253, 0.0
        %v1318 = vmax.f32 %v1254, 0.0
        %v1319 = vmax.f32 %v1255, 0.0
        %v1320 = vmax.f32 %v1256, 0.0
        %v1321 = vmax.f32 %v1257, 0.0
        %v1322 = vmax.f32 %v1258, 0.0
        %v1323 = vmax.f32 %v1259, 0.0
        %v1324 = vmax.f32 %v1260, 0.0
        %v1325 = vmax.f32 %v1261, 0.0
        %v1326 = vmax.f32 %v1262, 0.0
        %v1327 = vmax.f32 %v1263, 0.0
        %v1328 = vmax.f32 %v1264, 0.0
        %v1329 = vmax.f32 %v1265, 0.0
        %v1330 = vmax.f32 %v1266, 0.0
        %v1331 = vmax.f32 %v1267, 0.0
        %v1332 = vmax.f32 %v1268, 0.0
        %v1333 = vmax.f32 %v1269, 0.0
        %v1334 = vmax.f32 %v1270, 0.0
        %v1335 = vmax.f32 %v1271, 0.0
        %v1336 = vmax.f32 %v1272, 0.0
        %v1337 = vmax.f32 %v1273, 0.0
        %v1338 = vmax.f32 %v1274, 0.0
        %v1339 = vmax.f32 %v1275, 0.0
        %v1340 = vmax.f32 %v1276, 0.0
        %v1341 = vmax.f32 %v1277, 0.0
        %v1342 = vmax.f32 %v1278, 0.0
        %v1343 = vmax.f32 %v1279, 0.0
        %v1344 = vmax.f32 %v1280, 0.0
        %v1345 = vmax.f32 %v1281, 0.0
        %v1346 = vmax.f32 %v1282, 0.0
        %v1347 = vmax.f32 %v1283, 0.0
        %v1348 = vmax.f32 %v1284, 0.0
        %v1349 = vmax.f32 %v1285, 0.0
        %v1350 = vmax.f32 %v1286, 0.0
        %v1351 = vmax.f32 %v1287, 0.0
        %v1352 = vmax.f32 %v1288, 0.0
        %v1353 = vmax.f32 %v1289, 0.0
        %v1354 = vmax.f32 %v1290, 0.0
        %v1355 = vmax.f32 %v1291, 0.0
        %v1356 = vmax.f32 %v1292, 0.0
        %v1357 = vmax.f32 %v1293, 0.0
        %v1358 = vmax.f32 %v1294, 0.0
        %v1359 = vmax.f32 %v1295, 0.0
        %v1360 = vmax.f32 %v1296, 0.0
        %v1361 = vmax.f32 %v1297, 0.0
        %v1362 = vmax.f32 %v1298, 0.0
        %v1363 = vpack.c.bf16 %v1299, %v1299
        %v1364 = vpack.c.bf16 %v1300, %v1300
        %v1365 = vpack.c.bf16 %v1301, %v1301
        %v1366 = vpack.c.bf16 %v1302, %v1302
        %v1367 = vpack.c.bf16 %v1303, %v1303
        %v1368 = vpack.c.bf16 %v1304, %v1304
        %v1369 = vpack.c.bf16 %v1305, %v1305
        %v1370 = vpack.c.bf16 %v1306, %v1306
        %v1371 = vpack.c.bf16 %v1307, %v1307
        %v1372 = vpack.c.bf16 %v1308, %v1308
        %v1373 = vpack.c.bf16 %v1309, %v1309
        %v1374 = vpack.c.bf16 %v1310, %v1310
        %v1375 = vpack.c.bf16 %v1311, %v1311
        %v1376 = vpack.c.bf16 %v1312, %v1312
        %v1377 = vpack.c.bf16 %v1313, %v1313
        %v1378 = vpack.c.bf16 %v1314, %v1314
        %v1379 = vpack.c.bf16 %v1315, %v1315
        %v1380 = vpack.c.bf16 %v1316, %v1316
        %v1381 = vpack.c.bf16 %v1317, %v1317
        %v1382 = vpack.c.bf16 %v1318, %v1318
        %v1383 = vpack.c.bf16 %v1319, %v1319
        %v1384 = vpack.c.bf16 %v1320, %v1320
        %v1385 = vpack.c.bf16 %v1321, %v1321
        %v1386 = vpack.c.bf16 %v1322, %v1322
        %v1387 = vpack.c.bf16 %v1323, %v1323
        %v1388 = vpack.c.bf16 %v1324, %v1324
        %v1389 = vpack.c.bf16 %v1325, %v1325
        %v1390 = vpack.c.bf16 %v1326, %v1326
        %v1391 = vpack.c.bf16 %v1327, %v1327
        %v1392 = vpack.c.bf16 %v1328, %v1328
        %v1393 = vpack.c.bf16 %v1329, %v1329
        %v1394 = vpack.c.bf16 %v1330, %v1330
        %v1395 = vpack.c.bf16 %v1331, %v1331
        %v1396 = vpack.c.bf16 %v1332, %v1332
        %v1397 = vpack.c.bf16 %v1333, %v1333
        %v1398 = vpack.c.bf16 %v1334, %v1334
        %v1399 = vpack.c.bf16 %v1335, %v1335
        %v1400 = vpack.c.bf16 %v1336, %v1336
        %v1401 = vpack.c.bf16 %v1337, %v1337
        %v1402 = vpack.c.bf16 %v1338, %v1338
        %v1403 = vpack.c.bf16 %v1339, %v1339
        %v1404 = vpack.c.bf16 %v1340, %v1340
        %v1405 = vpack.c.bf16 %v1341, %v1341
        %v1406 = vpack.c.bf16 %v1342, %v1342
        %v1407 = vpack.c.bf16 %v1343, %v1343
        %v1408 = vpack.c.bf16 %v1344, %v1344
        %v1409 = vpack.c.bf16 %v1345, %v1345
        %v1410 = vpack.c.bf16 %v1346, %v1346
        %v1411 = vpack.c.bf16 %v1347, %v1347
        %v1412 = vpack.c.bf16 %v1348, %v1348
        %v1413 = vpack.c.bf16 %v1349, %v1349
        %v1414 = vpack.c.bf16 %v1350, %v1350
        %v1415 = vpack.c.bf16 %v1351, %v1351
        %v1416 = vpack.c.bf16 %v1352, %v1352
        %v1417 = vpack.c.bf16 %v1353, %v1353
        %v1418 = vpack.c.bf16 %v1354, %v1354
        %v1419 = vpack.c.bf16 %v1355, %v1355
        %v1420 = vpack.c.bf16 %v1356, %v1356
        %v1421 = vpack.c.bf16 %v1357, %v1357
        %v1422 = vpack.c.bf16 %v1358, %v1358
        %v1423 = vpack.c.bf16 %v1359, %v1359
        %v1424 = vpack.c.bf16 %v1360, %v1360
        %v1425 = vpack.c.bf16 %v1361, %v1361
        %v1426 = vpack.c.bf16 %v1362, %v1362
        %1427 = vst [vmem:[%s310] sm:$0xf] %v1363
        %1428 = vst [vmem:[%s310 + $0x4] sm:$0xf] %v1364
        %1429 = vst [vmem:[%s310 + $0x8] sm:$0xf] %v1365
        %1430 = vst [vmem:[%s310 + $0xc] sm:$0xf] %v1366
        %1431 = vst [vmem:[%s310 + $0x10] sm:$0xf] %v1367
        %1432 = vst [vmem:[%s310 + $0x14] sm:$0xf] %v1368
        %1433 = vst [vmem:[%s310 + $0x18] sm:$0xf] %v1369
        %1434 = vst [vmem:[%s310 + $0x1c] sm:$0xf] %v1370
        %1435 = vst [vmem:[%s310 + $0x20] sm:$0xf] %v1371
        %1436 = vst [vmem:[%s310 + $0x24] sm:$0xf] %v1372
        %1437 = vst [vmem:[%s310 + $0x28] sm:$0xf] %v1373
        %1438 = vst [vmem:[%s310 + $0x2c] sm:$0xf] %v1374
        %1439 = vst [vmem:[%s310 + $0x30] sm:$0xf] %v1375
        %1440 = vst [vmem:[%s310 + $0x34] sm:$0xf] %v1376
        %1441 = vst [vmem:[%s310 + $0x38] sm:$0xf] %v1377
        %1442 = vst [vmem:[%s310 + $0x3c] sm:$0xf] %v1378
        %1443 = vst [vmem:[%s310 + $0x40] sm:$0xf] %v1379
        %1444 = vst [vmem:[%s310 + $0x44] sm:$0xf] %v1380
        %1445 = vst [vmem:[%s310 + $0x48] sm:$0xf] %v1381
        %1446 = vst [vmem:[%s310 + $0x4c] sm:$0xf] %v1382
        %1447 = vst [vmem:[%s310 + $0x50] sm:$0xf] %v1383
        %1448 = vst [vmem:[%s310 + $0x54] sm:$0xf] %v1384
        %1449 = vst [vmem:[%s310 + $0x58] sm:$0xf] %v1385
        %1450 = vst [vmem:[%s310 + $0x5c] sm:$0xf] %v1386
        %1451 = vst [vmem:[%s310 + $0x60] sm:$0xf] %v1387
        %1452 = vst [vmem:[%s310 + $0x64] sm:$0xf] %v1388
        %1453 = vst [vmem:[%s310 + $0x68] sm:$0xf] %v1389
        %1454 = vst [vmem:[%s310 + $0x6c] sm:$0xf] %v1390
        %1455 = vst [vmem:[%s310 + $0x70] sm:$0xf] %v1391
        %1456 = vst [vmem:[%s310 + $0x74] sm:$0xf] %v1392
        %1457 = vst [vmem:[%s310 + $0x78] sm:$0xf] %v1393
        %1458 = vst [vmem:[%s310 + $0x7c] sm:$0xf] %v1394
        %1459 = vst [vmem:[%s310 + $0x80] sm:$0xf] %v1395
        %1460 = vst [vmem:[%s310 + $0x84] sm:$0xf] %v1396
        %1461 = vst [vmem:[%s310 + $0x88] sm:$0xf] %v1397
        %1462 = vst [vmem:[%s310 + $0x8c] sm:$0xf] %v1398
        %1463 = vst [vmem:[%s310 + $0x90] sm:$0xf] %v1399
        %1464 = vst [vmem:[%s310 + $0x94] sm:$0xf] %v1400
        %1465 = vst [vmem:[%s310 + $0x98] sm:$0xf] %v1401
        %1466 = vst [vmem:[%s310 + $0x9c] sm:$0xf] %v1402
        %1467 = vst [vmem:[%s310 + $0xa0] sm:$0xf] %v1403
        %1468 = vst [vmem:[%s310 + $0xa4] sm:$0xf] %v1404
        %1469 = vst [vmem:[%s310 + $0xa8] sm:$0xf] %v1405
        %1470 = vst [vmem:[%s310 + $0xac] sm:$0xf] %v1406
        %1471 = vst [vmem:[%s310 + $0xb0] sm:$0xf] %v1407
        %1472 = vst [vmem:[%s310 + $0xb4] sm:$0xf] %v1408
        %1473 = vst [vmem:[%s310 + $0xb8] sm:$0xf] %v1409
        %1474 = vst [vmem:[%s310 + $0xbc] sm:$0xf] %v1410
        %1475 = vst [vmem:[%s310 + $0xc0] sm:$0xf] %v1411
        %1476 = vst [vmem:[%s310 + $0xc4] sm:$0xf] %v1412
        %1477 = vst [vmem:[%s310 + $0xc8] sm:$0xf] %v1413
        %1478 = vst [vmem:[%s310 + $0xcc] sm:$0xf] %v1414
        %1479 = vst [vmem:[%s310 + $0xd0] sm:$0xf] %v1415
        %1480 = vst [vmem:[%s310 + $0xd4] sm:$0xf] %v1416
        %1481 = vst [vmem:[%s310 + $0xd8] sm:$0xf] %v1417
        %1482 = vst [vmem:[%s310 + $0xdc] sm:$0xf] %v1418
        %1483 = vst [vmem:[%s310 + $0xe0] sm:$0xf] %v1419
        %1484 = vst [vmem:[%s310 + $0xe4] sm:$0xf] %v1420
        %1485 = vst [vmem:[%s310 + $0xe8] sm:$0xf] %v1421
        %1486 = vst [vmem:[%s310 + $0xec] sm:$0xf] %v1422
        %1487 = vst [vmem:[%s310 + $0xf0] sm:$0xf] %v1423
        %1488 = vst [vmem:[%s310 + $0xf4] sm:$0xf] %v1424
        %1489 = vst [vmem:[%s310 + $0xf8] sm:$0xf] %v1425
        %1490 = vst [vmem:[%s310 + $0xfc] sm:$0xf] %v1426
        %s1491 = sand.u32 %s160, 1
        %s1492 = scalar_lea.sflag [#allocation4], %s1491
        %s1493 = sand.u32 %s160, 1
        %s1494 = smul.addr %s1493, 256
        %s1495 = scalar_lea.vmem [#allocation10], %s1494
        // Predicated region
        $region53: #{tpu_custom_call.1} parent=35 // pred_check
          %p1496 = pneg %p170
        $region54: #{tpu_custom_call.1} parent=35 // pred_check_branch
          %1498 = sbr.rel (%p1496) target = $region56
        $region55: #{tpu_custom_call.1} parent=35 // pred_region
          %s1499 = smul.u32 64, %s28
          %1501 = vsyncadd %s1492, 0
          %s1502 = sadd.s32 %s30, %s1499
          %s1503 = smul.addr %s29, 256
          %s1504 = sadd.s32 %s1502, %s1503
          %s1505 = smul.addr %s1504, 4
          %s1506 = scalar_lea.hbm %s4, %s1505
          %s1507 = sshll.u32 %s1495, 4
          %s1508 = int_to_ptr.vmem [resolvable:$true] %s1507
          %s1509 = sshll.u32 %s1506, 4
          %s1510 = int_to_ptr.hbm [resolvable:$true] %s1509
          %1515 = dma.vmem_to_hbm [thread:$0]  %s1508, 4096, %s1510, %s1492, 64, 64, 4
        $region56: #{tpu_custom_call.1} parent=35 // pred_fallthru
          _
      $region36: #{tpu_custom_call.1} parent=5 // pred_fallthru
        _
      %p1516 = scmp.le.s32.totalorder 2, %s18
      // Predicated region
      $region57: #{tpu_custom_call.1} parent=5 // pred_check
        %p1517 = pneg %p1516
      $region58: #{tpu_custom_call.1} parent=5 // pred_check_branch
        %1519 = sbr.rel (%p1517) target = $region60
      $region59: #{tpu_custom_call.1} parent=5 // pred_region
        %s1520 = ssub.s32 %s18, 2
        // Predicated region
        $region61: #{tpu_custom_call.1} parent=59 // pred_check
          %p1521 = pneg %p176
        $region62: #{tpu_custom_call.1} parent=59 // pred_check_branch
          %1523 = sbr.rel (%p1521) target = $region64
        $region63: #{tpu_custom_call.1} parent=59 // pred_region
          %s1524 = sand.u32 %s161, 1
          %s1525 = scalar_lea.sflag [#allocation4], %s1524
          %s1526 = sand.u32 %s161, 1
          %s1527 = smul.addr %s1526, 256
          %s1528 = scalar_lea.vmem [#allocation10], %s1527
          %1530 = dma.done %s1525, 4096
        $region64: #{tpu_custom_call.1} parent=59 // pred_fallthru
          _
      $region60: #{tpu_custom_call.1} parent=5 // pred_fallthru
        _
    $region6: #{tpu_custom_call.1} parent=1 // loop_footer
      %s22 = sadd.s32 1, %s18
    $region7: #{tpu_custom_call.1} parent=1 // loop_footer_branch
      %17 = sbr.rel target = $region3
    $region8: #{tpu_custom_call.1} parent=1 // loop_exit
      _
    %1531 = vsyncpa [#allocation3], 1
    %s1532 = scalar_lea.sflag [#allocation3], 1
    %1533 = vsyncpa %s1532, 1
    %1534 = vsyncpa [#allocation6], 1
    %1535 = vsyncpa [#allocation9], 1
    %1536 = vsyncpa [#allocation4], 1
    %s1537 = scalar_lea.sflag [#allocation4], 1
    %1538 = vsyncpa %s1537, 1

</llo_original>
